<compile_context>
chip_gen: v6e
topology: v6e:2x2x1
jax: 0.10.0
libtpu: 0.0.40
codegen_flags: <defaults>
</compile_context>

<pallas_src>
import functools

import jax
import jax.numpy as jnp
from jax import lax
from jax.experimental import pallas as pl
from jax.experimental.pallas import tpu as pltpu

_HIGHEST = jax.lax.Precision.HIGHEST


def _budgets():
    """(per-block byte budget, scoped-VMEM limit) derived per TPU generation."""
    phys = None
    try:
        phys = getattr(pltpu.get_tpu_info(), "vmem_capacity_bytes", None)
    except Exception:
        phys = None
    if phys is None or phys <= 80 * 1024 * 1024:      # v7x (64 MiB / core) or unknown
        return 4 * 1024 * 1024, 48 * 1024 * 1024
    return 6 * 1024 * 1024, 64 * 1024 * 1024          # v5e / v6e (128 MiB physical)


def _pick_lane_tile(hw, c, itemsize, budget_bytes):
    """Largest multiple of 128 that divides H*W and keeps a (C, TS) block in budget."""
    if hw % 128 != 0:
        # TODO(synk): pad H*W up to a multiple of 128 instead of one full block.
        return hw
    best = 128
    for ts in range(128, hw + 1, 128):
        if hw % ts == 0 and c * ts * itemsize <= budget_bytes:
            best = ts
    return best


def _sigmoid(z):
    # Stable: tanh never overflows (and runs on the EUP slot), unlike exp(-z).
    return 0.5 * (jnp.tanh(0.5 * z) + 1.0)


# --------------------------------------------------------------------------
# Kernel 1: global avg+max pool over H*W (lane-resident partials) fused with
# the shared channel-attention MLP + sigmoid at the last reduction step.
# x block (1, C, TS)  ->  ca output (N, C, 1), written once per n.
# --------------------------------------------------------------------------
def _pool_ca_kernel(x_ref, w1t_ref, w2t_ref, ca_ref, sum_acc, max_acc, *, inv_hw):
    r = pl.program_id(1)
    x = x_ref[0]                                   # (C, TS), spatial on lanes
    lw = sum_acc.shape[1]
    nchunks = x.shape[1] // lw                     # static

    @pl.when(r == 0)
    def _():
        sum_acc[...] = jnp.zeros(sum_acc.shape, jnp.float32)
        max_acc[...] = jnp.full(max_acc.shape, -jnp.inf, jnp.float32)

    # Lane-resident partials: pure VPU add/max per 128-lane chunk, hidden
    # entirely under the DMA stream.
    s = sum_acc[...]
    m = max_acc[...]
    for i in range(nchunks):
        chunk = x[:, i * lw:(i + 1) * lw]
        s = s + chunk
        m = jnp.maximum(m, chunk)
    sum_acc[...] = s
    max_acc[...] = m

    # Final step: single cross-lane reduce, then the tiny shared MLP + sigmoid.
    @pl.when(r == pl.num_programs(1) - 1)
    def _():
        avg_col = jnp.sum(s, axis=1, keepdims=True) * inv_hw   # (C, 1)
        max_col = jnp.max(m, axis=1, keepdims=True)            # (C, 1)

        def fc(v_col):                                         # (C, 1) -> (C, 1)
            h = jnp.maximum(
                jnp.dot(w1t_ref[...], v_col,
                        preferred_element_type=jnp.float32, precision=_HIGHEST),
                0.0)
            return jnp.dot(w2t_ref[...], h,
                           preferred_element_type=jnp.float32, precision=_HIGHEST)

        ca_ref[0] = _sigmoid(fc(avg_col) + fc(max_col))        # (C, 1)


def pool_and_channel_attention(x_flat, w1t, w2t, *, ts, vmem_limit):
    N, C, HW = x_flat.shape
    Ch = w1t.shape[0]
    lw = 128 if ts % 128 == 0 else ts
    kernel = functools.partial(_pool_ca_kernel, inv_hw=1.0 / float(HW))
    return pl.pallas_call(
        kernel,
        out_shape=jax.ShapeDtypeStruct((N, C, 1), jnp.float32),
        grid_spec=pltpu.PrefetchScalarGridSpec(
            num_scalar_prefetch=0,
            grid=(N, HW // ts),
            in_specs=[
                pl.BlockSpec((1, C, ts), lambda n, r: (n, 0, r)),
                pl.BlockSpec((Ch, C), lambda n, r: (0, 0)),
                pl.BlockSpec((C, Ch), lambda n, r: (0, 0)),
            ],
            out_specs=pl.BlockSpec((1, C, 1), lambda n, r: (n, 0, 0)),
            scratch_shapes=[pltpu.VMEM((C, lw), jnp.float32),
                            pltpu.VMEM((C, lw), jnp.float32)],
        ),
        compiler_params=pltpu.CompilerParams(
            dimension_semantics=("parallel", "arbitrary"),
            vmem_limit_bytes=vmem_limit),
    )(x_flat, w1t, w2t)


# --------------------------------------------------------------------------
# Kernel 2: channel mean / max of (ca * x), lane-dense  ->  (N, 2, H*W).
# --------------------------------------------------------------------------
def _stats_kernel(x_ref, ca_ref, mm_ref, *, inv_c):
    t = x_ref[0] * ca_ref[0]                                   # (C, TS)
    mm_ref[0, 0:1] = jnp.sum(t, axis=0, keepdims=True) * inv_c
    mm_ref[0, 1:2] = jnp.max(t, axis=0, keepdims=True)


def stats_map(x_flat, ca, *, ts, vmem_limit):
    N, C, HW = x_flat.shape
    kernel = functools.partial(_stats_kernel, inv_c=1.0 / float(C))
    return pl.pallas_call(
        kernel,
        out_shape=jax.ShapeDtypeStruct((N, 2, HW), jnp.float32),
        grid_spec=pltpu.PrefetchScalarGridSpec(
            num_scalar_prefetch=0,
            grid=(N, HW // ts),
            in_specs=[
                pl.BlockSpec((1, C, ts), lambda n, r: (n, 0, r)),
                pl.BlockSpec((1, C, 1), lambda n, r: (n, 0, 0)),
            ],
            out_specs=pl.BlockSpec((1, 2, ts), lambda n, r: (n, 0, r)),
        ),
        compiler_params=pltpu.CompilerParams(
            dimension_semantics=("parallel", "parallel"),
            vmem_limit_bytes=vmem_limit),
    )(x_flat, ca)


# --------------------------------------------------------------------------
# Kernel 3: 7x7, 2-in/1-out spatial conv + sigmoid on the tiny padded stats
# map.  SMEM weights; one lane-shifted slice per (channel, kw); 4 independent
# accumulators initialized from their first tap.
# --------------------------------------------------------------------------
def _sa_conv_kernel(mm_ref, w_ref, sa_ref, *, H, W):
    accs = [None, None, None, None]
    idx = 0
    for c2 in range(2):
        plane = mm_ref[0, c2]                                  # (H+6, W+6)
        for kw in range(7):
            col = plane[:, kw:kw + W]                          # (H+6, W): one lane shift per (c2, kw)
            for kh in range(7):
                tap = col[kh:kh + H, :] * w_ref[c2 * 49 + kh * 7 + kw]
                accs[idx] = tap if accs[idx] is None else accs[idx] + tap
                idx = (idx + 1) % 4
    sa_ref[0, 0] = _sigmoid((accs[0] + accs[1]) + (accs[2] + accs[3]))


def spatial_attention(mm_pad, w_sa_flat, *, vmem_limit):
    N, _, Hp, Wp = mm_pad.shape
    H, W = Hp - 6, Wp - 6
    kernel = functools.partial(_sa_conv_kernel, H=H, W=W)
    return pl.pallas_call(
        kernel,
        out_shape=jax.ShapeDtypeStruct((N, 1, H, W), jnp.float32),
        grid_spec=pltpu.PrefetchScalarGridSpec(
            num_scalar_prefetch=0,
            grid=(N,),
            in_specs=[
                pl.BlockSpec((1, 2, Hp, Wp), lambda n: (n, 0, 0, 0)),
                pl.BlockSpec(memory_space=pltpu.MemorySpace.SMEM),
            ],
            out_specs=pl.BlockSpec((1, 1, H, W), lambda n: (n, 0, 0, 0)),
        ),
        compiler_params=pltpu.CompilerParams(
            dimension_semantics=("parallel",),
            vmem_limit_bytes=vmem_limit),
    )(mm_pad, w_sa_flat)


# --------------------------------------------------------------------------
# Kernel 4: fused  out = relu( sa * (ca * x) + x ), lane-dense.
# --------------------------------------------------------------------------
def _apply_kernel(x_ref, ca_ref, sa_ref, o_ref):
    x = x_ref[...]                                 # (1, C, TS)
    t = x * ca_ref[...]                            # (1, C, 1) channel gate
    o_ref[...] = jnp.maximum(sa_ref[...] * t + x, 0.0)   # sa: (1, 1, TS)


def fused_apply(x_flat, ca, sa_flat, *, ts, vmem_limit):
    N, C, HW = x_flat.shape
    return pl.pallas_call(
        _apply_kernel,
        out_shape=jax.ShapeDtypeStruct((N, C, HW), jnp.float32),
        grid_spec=pltpu.PrefetchScalarGridSpec(
            num_scalar_prefetch=0,
            grid=(N, HW // ts),
            in_specs=[
                pl.BlockSpec((1, C, ts), lambda n, r: (n, 0, r)),
                pl.BlockSpec((1, C, 1), lambda n, r: (n, 0, 0)),
                pl.BlockSpec((1, 1, ts), lambda n, r: (n, 0, r)),
            ],
            out_specs=pl.BlockSpec((1, C, ts), lambda n, r: (n, 0, r)),
        ),
        compiler_params=pltpu.CompilerParams(
            dimension_semantics=("parallel", "parallel"),
            vmem_limit_bytes=vmem_limit),
    )(x_flat, ca, sa_flat)


# --------------------------------------------------------------------------
# Parameters (deterministic) and full forward (NCHW in, NCHW out).
# --------------------------------------------------------------------------
def make_params(key, inplanes):
    assert inplanes >= 16, "ChannelAttention uses inplanes // 16 hidden units"
    hidden = inplanes // 16
    k1, k2, k3 = jax.random.split(key, 3)
    return {
        "w1": jax.random.normal(k1, (inplanes, hidden), jnp.float32) * 0.1,
        "w2": jax.random.normal(k2, (hidden, inplanes), jnp.float32) * 0.1,
        "w_sa": jax.random.normal(k3, (2, 7, 7), jnp.float32) * 0.1,
    }


def se_block_forward(x, params):
    N, C, H, W = x.shape
    HW = H * W
    block_budget, vmem_limit = _budgets()
    ts = _pick_lane_tile(HW, C, x.dtype.itemsize, block_budget)

    x_flat = x.reshape(N, C, HW)                   # free: NCHW is contiguous

    # Channel attention: pool + shared MLP + sigmoid in one fused kernel.
    ca = pool_and_channel_attention(
        x_flat, jnp.transpose(params["w1"]), jnp.transpose(params["w2"]),
        ts=ts, vmem_limit=vmem_limit)              # (N, C, 1)

    # Spatial attention on t = ca * x.
    mm = stats_map(x_flat, ca, ts=ts, vmem_limit=vmem_limit)            # (N, 2, HW)
    mm_pad = jnp.pad(mm.reshape(N, 2, H, W), ((0, 0), (0, 0), (3, 3), (3, 3)))
    sa = spatial_attention(mm_pad, params["w_sa"].reshape(-1),
                           vmem_limit=vmem_limit)                       # (N, 1, H, W)

    # Fused gate-apply + residual + ReLU (lane-dense).
    out = fused_apply(x_flat, ca, sa.reshape(N, 1, HW),
                      ts=ts, vmem_limit=vmem_limit)                     # (N, C, HW)
    return out.reshape(N, C, H, W)


# --------------------------------------------------------------------------
# Pure-JAX reference (correctness check only).
# --------------------------------------------------------------------------
def reference_forward(x, params):
    avg = jnp.mean(x, axis=(2, 3))
    mx = jnp.max(x, axis=(2, 3))

    def fc(v):
        h = jnp.maximum(jnp.dot(v, params["w1"], precision=_HIGHEST), 0.0)
        return jnp.dot(h, params["w2"], precision=_HIGHEST)

    ca = jax.nn.sigmoid(fc(avg) + fc(mx))[:, :, None, None]
    t = ca * x
    mm = jnp.concatenate([jnp.mean(t, axis=1, keepdims=True),
                          jnp.max(t, axis=1, keepdims=True)], axis=1)
    sa = jax.nn.sigmoid(lax.conv_general_dilated(
        mm, params["w_sa"][None], (1, 1), ((3, 3), (3, 3)),
        dimension_numbers=("NCHW", "OIHW", "NCHW"), precision=_HIGHEST))
    return jnp.maximum(sa * t + x, 0.0)


if __name__ == "__main__":
    key = jax.random.PRNGKey(0)
    kx, kp = jax.random.split(key)

    N, C, H, W = 2, 32, 16, 16          # inplanes must be >= 16 (fc uses C // 16)
    x = jax.random.normal(kx, (N, C, H, W), jnp.float32)
    params = make_params(kp, C)

    out = jax.block_until_ready(se_block_forward(x, params))
    assert out.shape == (N, C, H, W), out.shape

    ref = jax.block_until_ready(reference_forward(x, params))
    # HIGHEST precision on the FC dots keeps kernel/reference within ~1e-5;
    # the loose tolerance is only a safety net.
    assert jnp.allclose(out, ref, rtol=1e-2, atol=1e-2), (
        float(jnp.max(jnp.abs(out - ref))))

    print("KERNEL_OK")
</pallas_src>

<mosaic_0001>
module attributes {stable_mosaic.version = 11 : i64} {
  func.func @_pool_ca_kernel(%arg0: i32, %arg1: i32, %arg2: memref<1x32x256xf32, #tpu.memory_space<vmem>>, %arg3: memref<2x32xf32, #tpu.memory_space<vmem>>, %arg4: memref<32x2xf32, #tpu.memory_space<vmem>>, %arg5: memref<1x32x1xf32, #tpu.memory_space<vmem>>, %arg6: memref<32x128xf32, #tpu.memory_space<vmem>>, %arg7: memref<32x128xf32, #tpu.memory_space<vmem>>) attributes {dimension_semantics = [#tpu.dimension_semantics<parallel>, #tpu.dimension_semantics<arbitrary>], iteration_bounds = array<i64: 2, 1>, scalar_prefetch = 0 : i64, scratch_operands = 2 : i64, tpu.core_type = #tpu.core_type<tc>, window_params = [{transform_indices = @transform_0, window_bounds = array<i64: 1, 32, 256>}, {pipeline_mode = #tpu.pipeline_mode<synchronous>, transform_indices = @transform_1, window_bounds = array<i64: 2, 32>}, {pipeline_mode = #tpu.pipeline_mode<synchronous>, transform_indices = @transform_2, window_bounds = array<i64: 32, 2>}, {transform_indices = @transform_3, window_bounds = array<i64: 1, 32, 1>}]} {
    %c0 = arith.constant 0 : index
    %c0_0 = arith.constant 0 : index
    %c0_1 = arith.constant 0 : index
    %0 = vector.load %arg2[%c0, %c0_0, %c0_1] : memref<1x32x256xf32, #tpu.memory_space<vmem>>, vector<1x32x256xf32>
    %1 = vector.shape_cast %0 : vector<1x32x256xf32> to vector<32x256xf32>
    %c0_i32 = arith.constant 0 : i32
    %2 = arith.cmpi eq, %arg1, %c0_i32 : i32
    %3 = arith.extui %2 : i1 to i32
    %c0_i32_2 = arith.constant 0 : i32
    %4 = arith.cmpi ne, %3, %c0_i32_2 : i32
    scf.if %4 {
      %cst = arith.constant 0.000000e+00 : f32
      %18 = vector.broadcast %cst : f32 to vector<32x128xf32>
      %c0_13 = arith.constant 0 : index
      %c0_14 = arith.constant 0 : index
      %19 = vector.load %arg6[%c0_13, %c0_14] : memref<32x128xf32, #tpu.memory_space<vmem>>, vector<32x128xf32>
      tpu.vector_store %arg6[%c0_13, %c0_14], %18 {strides = array<i32>} : memref<32x128xf32, #tpu.memory_space<vmem>>, vector<32x128xf32>,
      %cst_15 = arith.constant 0xFF800000 : f32
      %20 = vector.broadcast %cst_15 : f32 to vector<32x128xf32>
      %c0_16 = arith.constant 0 : index
      %c0_17 = arith.constant 0 : index
      %21 = vector.load %arg7[%c0_16, %c0_17] : memref<32x128xf32, #tpu.memory_space<vmem>>, vector<32x128xf32>
      tpu.vector_store %arg7[%c0_16, %c0_17], %20 {strides = array<i32>} : memref<32x128xf32, #tpu.memory_space<vmem>>, vector<32x128xf32>,
    } else {
    }
    %c0_3 = arith.constant 0 : index
    %c0_4 = arith.constant 0 : index
    %5 = vector.load %arg6[%c0_3, %c0_4] : memref<32x128xf32, #tpu.memory_space<vmem>>, vector<32x128xf32>
    %c0_5 = arith.constant 0 : index
    %c0_6 = arith.constant 0 : index
    %6 = vector.load %arg7[%c0_5, %c0_6] : memref<32x128xf32, #tpu.memory_space<vmem>>, vector<32x128xf32>
    %7 = vector.extract_strided_slice %1 {offsets = [0, 0], sizes = [32, 128], strides = [1, 1]} : vector<32x256xf32> to vector<32x128xf32>
    %8 = arith.addf %5, %7 : vector<32x128xf32>
    %9 = arith.maximumf %6, %7 : vector<32x128xf32>
    %10 = vector.extract_strided_slice %1 {offsets = [0, 128], sizes = [32, 128], strides = [1, 1]} : vector<32x256xf32> to vector<32x128xf32>
    %11 = arith.addf %8, %10 : vector<32x128xf32>
    %12 = arith.maximumf %9, %10 : vector<32x128xf32>
    %c0_7 = arith.constant 0 : index
    %c0_8 = arith.constant 0 : index
    %13 = vector.load %arg6[%c0_7, %c0_8] : memref<32x128xf32, #tpu.memory_space<vmem>>, vector<32x128xf32>
    tpu.vector_store %arg6[%c0_7, %c0_8], %11 {strides = array<i32>} : memref<32x128xf32, #tpu.memory_space<vmem>>, vector<32x128xf32>,
    %c0_9 = arith.constant 0 : index
    %c0_10 = arith.constant 0 : index
    %14 = vector.load %arg7[%c0_9, %c0_10] : memref<32x128xf32, #tpu.memory_space<vmem>>, vector<32x128xf32>
    tpu.vector_store %arg7[%c0_9, %c0_10], %12 {strides = array<i32>} : memref<32x128xf32, #tpu.memory_space<vmem>>, vector<32x128xf32>,
    %c0_i32_11 = arith.constant 0 : i32
    %15 = arith.cmpi eq, %arg1, %c0_i32_11 : i32
    %16 = arith.extui %15 : i1 to i32
    %c0_i32_12 = arith.constant 0 : i32
    %17 = arith.cmpi ne, %16, %c0_i32_12 : i32
    scf.if %17 {
      %cst = arith.constant dense<0.000000e+00> : vector<32xf32>
      %18 = vector.multi_reduction <add>, %11, %cst [1] : vector<32x128xf32> to vector<32xf32>
      %19 = vector.shape_cast %18 : vector<32xf32> to vector<32x1xf32>
      %cst_13 = arith.constant 3.906250e-03 : f32
      %20 = vector.broadcast %cst_13 : f32 to vector<32x1xf32>
      %21 = arith.mulf %19, %20 : vector<32x1xf32>
      %cst_14 = arith.constant dense<0xFF800000> : vector<32xf32>
      %22 = vector.multi_reduction <maximumf>, %12, %cst_14 [1] : vector<32x128xf32> to vector<32xf32>
      %23 = vector.shape_cast %22 : vector<32xf32> to vector<32x1xf32>
      %c0_15 = arith.constant 0 : index
      %c0_16 = arith.constant 0 : index
      %24 = vector.load %arg3[%c0_15, %c0_16] : memref<2x32xf32, #tpu.memory_space<vmem>>, vector<2x32xf32>
      %cst_17 = arith.constant dense<0.000000e+00> : vector<2x1xf32>
      %25 = tpu.matmul %24, %21, %cst_17 {dimension_numbers = #tpu.dot_dimension_numbers<[1], [0], [0], [1], [0, 0, 1, 1], [], []>, precision = #tpu.contract_precision<fp32>} : vector<2x32xf32>, vector<32x1xf32>, vector<2x1xf32> -> vector<2x1xf32>
      %cst_18 = arith.constant 0.000000e+00 : f32
      %26 = vector.broadcast %cst_18 : f32 to vector<2x1xf32>
      %27 = arith.maximumf %25, %26 : vector<2x1xf32>
      %c0_19 = arith.constant 0 : index
      %c0_20 = arith.constant 0 : index
      %28 = vector.load %arg4[%c0_19, %c0_20] : memref<32x2xf32, #tpu.memory_space<vmem>>, vector<32x2xf32>
      %cst_21 = arith.constant dense<0.000000e+00> : vector<32x1xf32>
      %29 = tpu.matmul %28, %27, %cst_21 {dimension_numbers = #tpu.dot_dimension_numbers<[1], [0], [0], [1], [0, 0, 1, 1], [], []>, precision = #tpu.contract_precision<fp32>} : vector<32x2xf32>, vector<2x1xf32>, vector<32x1xf32> -> vector<32x1xf32>
      %c0_22 = arith.constant 0 : index
      %c0_23 = arith.constant 0 : index
      %30 = vector.load %arg3[%c0_22, %c0_23] : memref<2x32xf32, #tpu.memory_space<vmem>>, vector<2x32xf32>
      %cst_24 = arith.constant dense<0.000000e+00> : vector<2x1xf32>
      %31 = tpu.matmul %30, %23, %cst_24 {dimension_numbers = #tpu.dot_dimension_numbers<[1], [0], [0], [1], [0, 0, 1, 1], [], []>, precision = #tpu.contract_precision<fp32>} : vector<2x32xf32>, vector<32x1xf32>, vector<2x1xf32> -> vector<2x1xf32>
      %cst_25 = arith.constant 0.000000e+00 : f32
      %32 = vector.broadcast %cst_25 : f32 to vector<2x1xf32>
      %33 = arith.maximumf %31, %32 : vector<2x1xf32>
      %c0_26 = arith.constant 0 : index
      %c0_27 = arith.constant 0 : index
      %34 = vector.load %arg4[%c0_26, %c0_27] : memref<32x2xf32, #tpu.memory_space<vmem>>, vector<32x2xf32>
      %cst_28 = arith.constant dense<0.000000e+00> : vector<32x1xf32>
      %35 = tpu.matmul %34, %33, %cst_28 {dimension_numbers = #tpu.dot_dimension_numbers<[1], [0], [0], [1], [0, 0, 1, 1], [], []>, precision = #tpu.contract_precision<fp32>} : vector<32x2xf32>, vector<2x1xf32>, vector<32x1xf32> -> vector<32x1xf32>
      %36 = arith.addf %29, %35 : vector<32x1xf32>
      %cst_29 = arith.constant 5.000000e-01 : f32
      %37 = vector.broadcast %cst_29 : f32 to vector<32x1xf32>
      %38 = arith.mulf %37, %36 : vector<32x1xf32>
      %39 = math.tanh %38 : vector<32x1xf32>
      %cst_30 = arith.constant 1.000000e+00 : f32
      %40 = vector.broadcast %cst_30 : f32 to vector<32x1xf32>
      %41 = arith.addf %39, %40 : vector<32x1xf32>
      %cst_31 = arith.constant 5.000000e-01 : f32
      %42 = vector.broadcast %cst_31 : f32 to vector<32x1xf32>
      %43 = arith.mulf %42, %41 : vector<32x1xf32>
      %c0_32 = arith.constant 0 : index
      %c0_33 = arith.constant 0 : index
      %c0_34 = arith.constant 0 : index
      %44 = vector.load %arg5[%c0_32, %c0_33, %c0_34] : memref<1x32x1xf32, #tpu.memory_space<vmem>>, vector<1x32x1xf32>
      %45 = vector.shape_cast %44 : vector<1x32x1xf32> to vector<32x1xf32>
      %46 = vector.shape_cast %43 : vector<32x1xf32> to vector<1x32x1xf32>
      tpu.vector_store %arg5[%c0_32, %c0_33, %c0_34], %46 {strides = array<i32>} : memref<1x32x1xf32, #tpu.memory_space<vmem>>, vector<1x32x1xf32>,
    } else {
    }
    return
  }
  func.func @transform_0(%arg0: i32, %arg1: i32) -> (i32, i32, i32) {
    %c0_i32 = arith.constant 0 : i32
    %c0_i32_0 = arith.constant 0 : i32
    return %arg0, %c0_i32, %arg1 : i32, i32, i32
  }
  func.func @transform_1(%arg0: i32, %arg1: i32) -> (i32, i32) {
    %c0_i32 = arith.constant 0 : i32
    %c0_i32_0 = arith.constant 0 : i32
    %c0_i32_1 = arith.constant 0 : i32
    return %c0_i32, %c0_i32_0 : i32, i32
  }
  func.func @transform_2(%arg0: i32, %arg1: i32) -> (i32, i32) {
    %c0_i32 = arith.constant 0 : i32
    %c0_i32_0 = arith.constant 0 : i32
    %c0_i32_1 = arith.constant 0 : i32
    return %c0_i32, %c0_i32_0 : i32, i32
  }
  func.func @transform_3(%arg0: i32, %arg1: i32) -> (i32, i32, i32) {
    %c0_i32 = arith.constant 0 : i32
    %c0_i32_0 = arith.constant 0 : i32
    %c0_i32_1 = arith.constant 0 : i32
    return %arg0, %c0_i32, %c0_i32_0 : i32, i32, i32
  }
}

</mosaic_0001>

<llo_original>
// kernel: tpu_custom_call.1
$region0: #{tpu_custom_call.1}
  #allocation0 [shape = 'u32[]', space=smem, size = 0x4, offset = 0x4, fixed_abs, tag = 'smem constant byte address 0x4 - core index']
  #allocation1 [shape = 'u32[144,128]{1,0:T(1,128)}', space=vmem, size = 0x12000, scoped, tag = 'internal scratch']
  #allocation2 [shape = 'f32[32,128]{1,0:T(8,128)}', space=vmem, size = 0x4000, scoped, tag = 'scratch operand']
  #allocation3 [shape = 'f32[32,128]{1,0:T(8,128)}', space=vmem, size = 0x4000, scoped, tag = 'scratch operand']
  %s0 = inlined_call_operand.hbm [shape: f32[2,32,256], index: 0, kind: input, shape index: {}]
  %s1 = inlined_call_operand.vmem [shape: f32[2,32], index: 1, kind: input, shape index: {}]
  %s2 = inlined_call_operand.vmem [shape: f32[32,2], index: 2, kind: input, shape index: {}]
  %s3 = inlined_call_operand.vmem [shape: f32[2,32,1], index: 3, kind: output, shape index: {}]
  %s4 = sld [smem:[#allocation0]]
  $region57: #{tpu_custom_call.1} parent=0
    _
  %s6 = ssub.s32 1, %s4
  %s7 = scalar_select 0, %s6, %s4
  $region1: #{tpu_custom_call.1} parent=0
    #allocation4 [shape = 'u8[65536]{0}', space=vmem, size = 0x10000, scoped, tag = 'input window, operand 0']
    #allocation5 [shape = 's32[2]{0}', space=sflag, size = 0x8, scoped, tag = 'scoped memory for tpu_custom_call.1']
    %8 = vsyncpa [#allocation5], 0
    %s9 = scalar_lea.sflag [#allocation5], 1
    %10 = vsyncpa %s9, 0
    loop: start=0, step=1, limit=4
    $region2: #{tpu_custom_call.1} parent=1 // loop_pre_header
      _
    $region3: #{tpu_custom_call.1} parent=1 // loop_header
      %s12 = sphi 0, %s16
      %p13 = scmp.ge.s32.totalorder %s12, 4
      %s19 = sphi 0, %s31
      %s20 = sphi 0, %s27
      %s21 = sphi 0, %s19
      %s22 = sphi 0, %s20
      %s23 = sphi 0, %s21
      %s24 = sphi 0, %s22
      %s36 = sphi 0, %s38
      %s39 = sphi 0, %s36
      %s40 = sphi 0, %s39
      %s56 = sphi 0, %s40
      %s60 = sphi 0, %s60
      %s62 = sphi 0, %s60
      %s63 = sphi 0, %s62
      %s77 = sphi 0, %s63
      %s81 = sphi 0, %s81
      %s83 = sphi 0, %s81
      %s84 = sphi 0, %s83
      %s98 = sphi 0, %s84
      %s104 = sphi 0, %s106
      %s107 = sphi 0, %s104
      %s108 = sphi 0, %s107
      %s124 = sphi 0, %s108
    $region4: #{tpu_custom_call.1} parent=1 // loop_header_branch
      %15 = sbr.rel (%p13) target = $region8
    $region5: #{tpu_custom_call.1} parent=1 // loop_body
      %s17 = ssub.s32 %s12, 1
      %s18 = ssub.s32 %s12, 2
      %s25 = sadd.s32 1, %s20
      %p26 = scmp.ge.s32.totalorder %s25, 1
      %s27 = scalar_select %p26, 0, %s25
      %s28 = sadd.s32 1, %s19
      %s29 = scalar_select %p26, %s28, %s19
      %p30 = scmp.ge.s32.totalorder %s29, 2
      %s31 = scalar_select %p30, 0, %s29
      %s32 = ssub.s32 %s19, %s31
      %s33 = ssub.s32 %s20, %s27
      %s34 = sor.u32 %s32, %s33
      %p35 = scmp.eq.s32.totalorder %s34, 0
      %s37 = sadd.s32 %s36, 1
      %s38 = scalar_select %p35, %s36, %s37
      %p41 = pneg %p35
      %p42 = scmp.eq.s32.totalorder %s12, 1
      %p43 = por %p41, %p42
      %p44 = scmp.ne.s32.totalorder %s36, %s39
      %p45 = scmp.eq.s32.totalorder %s12, 0
      %p46 = por %p44, %p45
      %p47 = scmp.ne.s32.totalorder %s36, %s39
      %p48 = scmp.eq.s32.totalorder %s17, 1
      %p49 = por %p47, %p48
      %p50 = scmp.ne.s32.totalorder %s39, %s40
      %p51 = scmp.eq.s32.totalorder %s17, 0
      %p52 = por %p50, %p51
      %p53 = scmp.ne.s32.totalorder %s39, %s40
      %p54 = scmp.eq.s32.totalorder %s18, 1
      %p55 = por %p53, %p54
      %p57 = scmp.ne.s32.totalorder %s40, %s56
      %p58 = scmp.eq.s32.totalorder %s18, 0
      %p59 = por %p57, %p58
      %s61 = sadd.s32 %s60, 1
      %p64 = scmp.eq.s32.totalorder %s12, 1
      %p65 = scmp.ne.s32.totalorder %s60, %s62
      %p66 = scmp.eq.s32.totalorder %s12, 0
      %p67 = por %p65, %p66
      %p68 = scmp.ne.s32.totalorder %s60, %s62
      %p69 = scmp.eq.s32.totalorder %s17, 1
      %p70 = por %p68, %p69
      %p71 = scmp.ne.s32.totalorder %s62, %s63
      %p72 = scmp.eq.s32.totalorder %s17, 0
      %p73 = por %p71, %p72
      %p74 = scmp.ne.s32.totalorder %s62, %s63
      %p75 = scmp.eq.s32.totalorder %s18, 1
      %p76 = por %p74, %p75
      %p78 = scmp.ne.s32.totalorder %s63, %s77
      %p79 = scmp.eq.s32.totalorder %s18, 0
      %p80 = por %p78, %p79
      %s82 = sadd.s32 %s81, 1
      %p85 = scmp.eq.s32.totalorder %s12, 1
      %p86 = scmp.ne.s32.totalorder %s81, %s83
      %p87 = scmp.eq.s32.totalorder %s12, 0
      %p88 = por %p86, %p87
      %p89 = scmp.ne.s32.totalorder %s81, %s83
      %p90 = scmp.eq.s32.totalorder %s17, 1
      %p91 = por %p89, %p90
      %p92 = scmp.ne.s32.totalorder %s83, %s84
      %p93 = scmp.eq.s32.totalorder %s17, 0
      %p94 = por %p92, %p93
      %p95 = scmp.ne.s32.totalorder %s83, %s84
      %p96 = scmp.eq.s32.totalorder %s18, 1
      %p97 = por %p95, %p96
      %p99 = scmp.ne.s32.totalorder %s84, %s98
      %p100 = scmp.eq.s32.totalorder %s18, 0
      %p101 = por %p99, %p100
      %s102 = ssub.s32 %s19, %s31
      %p103 = scmp.eq.s32.totalorder %s102, 0
      %s105 = sadd.s32 %s104, 1
      %s106 = scalar_select %p103, %s104, %s105
      %p109 = pneg %p103
      %p110 = scmp.eq.s32.totalorder %s12, 1
      %p111 = por %p109, %p110
      %p112 = scmp.ne.s32.totalorder %s104, %s107
      %p113 = scmp.eq.s32.totalorder %s12, 0
      %p114 = por %p112, %p113
      %p115 = scmp.ne.s32.totalorder %s104, %s107
      %p116 = scmp.eq.s32.totalorder %s17, 1
      %p117 = por %p115, %p116
      %p118 = scmp.ne.s32.totalorder %s107, %s108
      %p119 = scmp.eq.s32.totalorder %s17, 0
      %p120 = por %p118, %p119
      %p121 = scmp.ne.s32.totalorder %s107, %s108
      %p122 = scmp.eq.s32.totalorder %s18, 1
      %p123 = por %p121, %p122
      %p125 = scmp.ne.s32.totalorder %s108, %s124
      %p126 = scmp.eq.s32.totalorder %s18, 0
      %p127 = por %p125, %p126
      %p128 = scmp.le.s32.totalorder 1, %s12
      %p129 = scmp.lt.s32.totalorder %s12, 3
      %p130 = pnand %p128, %p129
      %p131 = pneg %p130
      // Predicated region
      $region9: #{tpu_custom_call.1} parent=5 // pred_check
        _
      $region10: #{tpu_custom_call.1} parent=5 // pred_check_branch
        %133 = sbr.rel (%p130) target = $region12
      $region11: #{tpu_custom_call.1} parent=5 // pred_region
        %s134 = ssub.s32 %s12, 1
        // Predicated region
        $region13: #{tpu_custom_call.1} parent=11 // pred_check
          %p135 = pneg %p73
        $region14: #{tpu_custom_call.1} parent=11 // pred_check_branch
          %137 = sbr.rel (%p135) target = $region16
        $region15: #{tpu_custom_call.1} parent=11 // pred_region
          _
        $region16: #{tpu_custom_call.1} parent=11 // pred_fallthru
          _
        // Predicated region
        $region17: #{tpu_custom_call.1} parent=11 // pred_check
          %p138 = pneg %p94
        $region18: #{tpu_custom_call.1} parent=11 // pred_check_branch
          %140 = sbr.rel (%p138) target = $region20
        $region19: #{tpu_custom_call.1} parent=11 // pred_region
          _
        $region20: #{tpu_custom_call.1} parent=11 // pred_fallthru
          _
      $region12: #{tpu_custom_call.1} parent=5 // pred_fallthru
        _
      %p141 = scmp.lt.s32.totalorder %s12, 2
      // Predicated region
      $region21: #{tpu_custom_call.1} parent=5 // pred_check
        %p142 = pneg %p141
      $region22: #{tpu_custom_call.1} parent=5 // pred_check_branch
        %144 = sbr.rel (%p142) target = $region24
      $region23: #{tpu_custom_call.1} parent=5 // pred_region
        // Predicated region
        $region25: #{tpu_custom_call.1} parent=23 // pred_check
          %p145 = pneg %p46
        $region26: #{tpu_custom_call.1} parent=23 // pred_check_branch
          %147 = sbr.rel (%p145) target = $region28
        $region27: #{tpu_custom_call.1} parent=23 // pred_region
          %s148 = sand.u32 %s36, 1
          %s149 = scalar_lea.sflag [#allocation5], %s148
          %s150 = sand.u32 %s36, 1
          %s151 = smul.addr %s150, 64
          %s152 = scalar_lea.vmem [#allocation4], %s151
          %s153 = smul.u32 2, %s20
          %s155 = ssub.s32 1024, 1024
          %156 = vsyncadd %s149, %s155
          %s157 = smul.addr %s19, 8
          %s158 = sadd.s32 %s153, %s157
          %s159 = smul.addr %s158, 128
          %s160 = scalar_lea.hbm %s0, %s159
          %s161 = sshll.u32 %s152, 4
          %s162 = int_to_ptr.vmem [resolvable:$true] %s161
          %167 = dma.hbm_to_vmem [thread:$0]  %s160, 1024, %s162, %s149, 256, 256, 16
        $region28: #{tpu_custom_call.1} parent=23 // pred_fallthru
          _
      $region24: #{tpu_custom_call.1} parent=5 // pred_fallthru
        _
      %p168 = scmp.le.s32.totalorder 1, %s12
      %p169 = scmp.lt.s32.totalorder %s12, 3
      %p170 = pnand %p168, %p169
      %p171 = pneg %p170
      // Predicated region
      $region29: #{tpu_custom_call.1} parent=5 // pred_check
        _
      $region30: #{tpu_custom_call.1} parent=5 // pred_check_branch
        %173 = sbr.rel (%p170) target = $region32
      $region31: #{tpu_custom_call.1} parent=5 // pred_region
        %s174 = ssub.s32 %s12, 1
        %s175 = sand.u32 %s39, 1
        %s176 = scalar_lea.sflag [#allocation5], %s175
        %s177 = sand.u32 %s39, 1
        %s178 = smul.addr %s177, 64
        %s179 = scalar_lea.vmem [#allocation4], %s178
        // Predicated region
        $region33: #{tpu_custom_call.1} parent=31 // pred_check
          %p180 = pneg %p52
        $region34: #{tpu_custom_call.1} parent=31 // pred_check_branch
          %182 = sbr.rel (%p180) target = $region36
        $region35: #{tpu_custom_call.1} parent=31 // pred_region
          %183 = dma.done %s176, 1024
        $region36: #{tpu_custom_call.1} parent=31 // pred_fallthru
          _
        %s184 = sand.u32 %s39, 1
        %s185 = scalar_lea.sflag [#allocation5], %s184
        %s186 = sand.u32 %s39, 1
        %s187 = smul.addr %s186, 64
        %s188 = scalar_lea.vmem [#allocation4], %s187
        %p189 = pneg %p52
        %p190 = pneg %p49
        %p191 = pneg %p73
        %p192 = pneg %p70
        %p193 = pneg %p94
        %p194 = pneg %p91
        %p195 = pneg %p120
        %p196 = pneg %p117
        %p197 = scmp.lt.s32.totalorder %s21, 1
        %s198 = scalar_select %p197, %s21, 1
        %s199 = smul.addr %s198, 4
        %s200 = smul.addr %s199, 8
        %s201 = scalar_lea.vmem %s3, %s200
        %s202 = smul.u32 2, %s22
        %p203 = scmp.lt.s32.totalorder %s21, 1
        %s204 = scalar_select %p203, %s21, 1
        %s205 = smul.addr %s204, 4
        %s206 = smul.addr %s205, 8
        %s207 = scalar_lea.vmem %s3, %s206
        %v208 = vld [vmem:[%s179] sm:$0xff]
        %v209 = vld [vmem:[%s179 + $0x8] sm:$0xff]
        %v210 = vld [vmem:[%s179 + $0x10] sm:$0xff]
        %v211 = vld [vmem:[%s179 + $0x18] sm:$0xff]
        %v212 = vld [vmem:[%s179 + $0x20] sm:$0xff]
        %v213 = vld [vmem:[%s179 + $0x28] sm:$0xff]
        %v214 = vld [vmem:[%s179 + $0x30] sm:$0xff]
        %v215 = vld [vmem:[%s179 + $0x38] sm:$0xff]
        %p216 = scmp.eq.s32.totalorder %s22, 0
        // Predicated region
        $region37: #{tpu_custom_call.1} parent=31 // pred_check
          %p217 = pneg %p216
        $region38: #{tpu_custom_call.1} parent=31 // pred_check_branch
          %219 = sbr.rel (%p217) target = $region40
        $region39: #{tpu_custom_call.1} parent=31 // pred_region
          %220 = vst [vmem:[#allocation2] sm:$0xff] 0.0
          %221 = vst [vmem:[#allocation2 + $0x8] sm:$0xff] 0.0
          %222 = vst [vmem:[#allocation2 + $0x10] sm:$0xff] 0.0
          %223 = vst [vmem:[#allocation2 + $0x18] sm:$0xff] 0.0
          %224 = vst [vmem:[#allocation3] sm:$0xff] -inf
          %225 = vst [vmem:[#allocation3 + $0x8] sm:$0xff] -inf
          %226 = vst [vmem:[#allocation3 + $0x10] sm:$0xff] -inf
          %227 = vst [vmem:[#allocation3 + $0x18] sm:$0xff] -inf
        $region40: #{tpu_custom_call.1} parent=31 // pred_fallthru
          _
        %v228 = vld [vmem:[#allocation2] sm:$0xff]
        %v229 = vld [vmem:[#allocation2 + $0x8] sm:$0xff]
        %v230 = vld [vmem:[#allocation2 + $0x10] sm:$0xff]
        %v231 = vld [vmem:[#allocation2 + $0x18] sm:$0xff]
        %v232 = vld [vmem:[#allocation3] sm:$0xff]
        %v233 = vld [vmem:[#allocation3 + $0x8] sm:$0xff]
        %v234 = vld [vmem:[#allocation3 + $0x10] sm:$0xff]
        %v235 = vld [vmem:[#allocation3 + $0x18] sm:$0xff]
        %v236 = vadd.f32 %v228, %v208
        %v237 = vadd.f32 %v229, %v210
        %v238 = vadd.f32 %v230, %v212
        %v239 = vadd.f32 %v231, %v214
        %v240 = vmax.f32 %v232, %v208
        %v241 = vmax.f32 %v233, %v210
        %v242 = vmax.f32 %v234, %v212
        %v243 = vmax.f32 %v235, %v214
        %v244 = vadd.f32 %v236, %v209
        %v245 = vadd.f32 %v237, %v211
        %v246 = vadd.f32 %v238, %v213
        %v247 = vadd.f32 %v239, %v215
        %v248 = vmax.f32 %v240, %v209
        %v249 = vmax.f32 %v241, %v211
        %v250 = vmax.f32 %v242, %v213
        %v251 = vmax.f32 %v243, %v215
        %252 = vst [vmem:[#allocation2] sm:$0xff] %v244
        %253 = vst [vmem:[#allocation2 + $0x8] sm:$0xff] %v245
        %254 = vst [vmem:[#allocation2 + $0x10] sm:$0xff] %v246
        %255 = vst [vmem:[#allocation2 + $0x18] sm:$0xff] %v247
        %256 = vst [vmem:[#allocation3] sm:$0xff] %v248
        %257 = vst [vmem:[#allocation3 + $0x8] sm:$0xff] %v249
        %258 = vst [vmem:[#allocation3 + $0x10] sm:$0xff] %v250
        %259 = vst [vmem:[#allocation3 + $0x18] sm:$0xff] %v251
        // Predicated region
        $region41: #{tpu_custom_call.1} parent=31 // pred_check
          %p260 = pneg %p216
        $region42: #{tpu_custom_call.1} parent=31 // pred_check_branch
          %262 = sbr.rel (%p260) target = $region44
        $region43: #{tpu_custom_call.1} parent=31 // pred_region
          %263 = vadd.xlane.f32.xlu0 %v244
          %v264 = vpop.xlane.xlu0 %263
          %265 = vadd.xlane.f32.xlu0 %v245
          %v266 = vpop.xlane.xlu0 %265
          %267 = vadd.xlane.f32.xlu0 %v246
          %v268 = vpop.xlane.xlu0 %267
          %269 = vadd.xlane.f32.xlu0 %v247
          %v270 = vpop.xlane.xlu0 %269
          %v271 = vmul.f32 %v264, 0.00390625
          %v272 = vmul.f32 %v266, 0.00390625
          %v273 = vmul.f32 %v268, 0.00390625
          %v274 = vmul.f32 %v270, 0.00390625
          %275 = vmax.xlane.f32.xlu0 %v248
          %v276 = vpop.xlane.xlu0 %275
          %277 = vmax.xlane.f32.xlu0 %v249
          %v278 = vpop.xlane.xlu0 %277
          %279 = vmax.xlane.f32.xlu0 %v250
          %v280 = vpop.xlane.xlu0 %279
          %281 = vmax.xlane.f32.xlu0 %v251
          %v282 = vpop.xlane.xlu0 %281
          %v283 = vld [vmem:[%s1] sm:$0x3]
          %vm284 = vcmask 261120
          %v286 = vsel %vm284, %v283, 0
          %288 = vmatprep.subr.mxu0 0.0
          %289 = vmatpush1.msra.mxu0 0.0
          %290 = vmatprep.subr.mxu0 0.0
          %291 = vmatpush1.msra.mxu0 0.0
          %292 = vmatprep.subr.mxu0 0.0
          %293 = vmatpush1.msra.mxu0 0.0
          %294 = vmatprep.subr.mxu0 0.0
          %295 = vmatpush1.msra.mxu0 0.0
          %296 = vmatprep.subr.mxu0 0.0
          %297 = vmatpush1.msra.mxu0 0.0
          %298 = vmatprep.subr.mxu0 0.0
          %299 = vmatpush1.msra.mxu0 0.0
          %300 = vmatprep.subr.mxu0 0.0
          %301 = vmatpush1.msra.mxu0 0.0
          %302 = vmatprep.subr.mxu0 0.0
          %303 = vmatpush1.msra.mxu0 0.0
          %304 = vmatprep.subr.mxu0 0.0
          %305 = vmatpush1.msra.mxu0 0.0
          %306 = vmatprep.subr.mxu0 0.0
          %307 = vmatpush1.msra.mxu0 0.0
          %308 = vmatprep.subr.mxu0 0.0
          %309 = vmatpush1.msra.mxu0 0.0
          %310 = vmatprep.subr.mxu0 0.0
          %311 = vmatpush1.msra.mxu0 0.0
          %312 = vmatprep.subr.mxu0 0.0
          %v313 = vand.u32 %v274, 4294901760
          %314 = vmatpush1.msra.mxu0 %v313
          %315 = vmatprep.subr.mxu0 0.0
          %v316 = vand.u32 %v273, 4294901760
          %317 = vmatpush1.msra.mxu0 %v316
          %318 = vmatprep.subr.mxu0 0.0
          %v319 = vand.u32 %v272, 4294901760
          %320 = vmatpush1.msra.mxu0 %v319
          %321 = vmatprep.subr.mxu0 0.0
          %v322 = vand.u32 %v271, 4294901760
          %323 = vmatpush1.msra.mxu0 %v322
          %324 = vmatprep.subr.mxu0 0.0
          %325 = vmatpush2.msra.mxu0 0.0
          %326 = vmatprep.subr.mxu0 0.0
          %327 = vmatpush2.msra.mxu0 0.0
          %328 = vmatprep.subr.mxu0 0.0
          %329 = vmatpush2.msra.mxu0 0.0
          %330 = vmatprep.subr.mxu0 0.0
          %331 = vmatpush2.msra.mxu0 0.0
          %332 = vmatprep.subr.mxu0 0.0
          %333 = vmatpush2.msra.mxu0 0.0
          %334 = vmatprep.subr.mxu0 0.0
          %335 = vmatpush2.msra.mxu0 0.0
          %336 = vmatprep.subr.mxu0 0.0
          %337 = vmatpush2.msra.mxu0 0.0
          %338 = vmatprep.subr.mxu0 0.0
          %339 = vmatpush2.msra.mxu0 0.0
          %340 = vmatprep.subr.mxu0 0.0
          %341 = vmatpush2.msra.mxu0 0.0
          %342 = vmatprep.subr.mxu0 0.0
          %343 = vmatpush2.msra.mxu0 0.0
          %344 = vmatprep.subr.mxu0 0.0
          %345 = vmatpush2.msra.mxu0 0.0
          %346 = vmatprep.subr.mxu0 0.0
          %347 = vmatpush2.msra.mxu0 0.0
          %348 = vmatprep.subr.mxu0 0.0
          %349 = vmatpush2.msra.mxu0 0.0
          %350 = vmatprep.subr.mxu0 0.0
          %351 = vmatpush2.msra.mxu0 0.0
          %352 = vmatprep.subr.mxu0 0.0
          %353 = vmatpush2.msra.mxu0 0.0
          %354 = vmatprep.subr.mxu0 0.0
          %355 = vmatpush2.msra.mxu0 0.0
          %356 = vmatprep.mubr.f32.mxu0 0.0
          %v357 = vand.u32 %v286, 4294901760
          %v358 = vsub.f32 %v286, %v357
          %v359 = vand.u32 %v358, 4294901760
          %v360 = vsub.f32 %v358, %v359
          %v361 = vand.u32 %v360, 4294901760
          %362 = vmatmul.mubr.f32.gmra.mxu0 %v361
          %v363 = vpop.f32.mrf.mxu0
          %v364 = vadd.f32 0.0, %v363
          %v365 = vpop.f32.mrf.mxu0
          %366 = vdwg.mxu0
          %367 = vmatprep.subr.mxu0 0.0
          %368 = vmatpush1.msra.mxu0 0.0
          %369 = vmatprep.subr.mxu0 0.0
          %370 = vmatpush1.msra.mxu0 0.0
          %371 = vmatprep.subr.mxu0 0.0
          %372 = vmatpush1.msra.mxu0 0.0
          %373 = vmatprep.subr.mxu0 0.0
          %374 = vmatpush1.msra.mxu0 0.0
          %375 = vmatprep.subr.mxu0 0.0
          %376 = vmatpush1.msra.mxu0 0.0
          %377 = vmatprep.subr.mxu0 0.0
          %378 = vmatpush1.msra.mxu0 0.0
          %379 = vmatprep.subr.mxu0 0.0
          %380 = vmatpush1.msra.mxu0 0.0
          %381 = vmatprep.subr.mxu0 0.0
          %382 = vmatpush1.msra.mxu0 0.0
          %383 = vmatprep.subr.mxu0 0.0
          %384 = vmatpush1.msra.mxu0 0.0
          %385 = vmatprep.subr.mxu0 0.0
          %386 = vmatpush1.msra.mxu0 0.0
          %387 = vmatprep.subr.mxu0 0.0
          %388 = vmatpush1.msra.mxu0 0.0
          %389 = vmatprep.subr.mxu0 0.0
          %390 = vmatpush1.msra.mxu0 0.0
          %391 = vmatprep.subr.mxu0 0.0
          %v392 = vand.u32 %v274, 4294901760
          %v393 = vsub.f32 %v274, %v392
          %v394 = vand.u32 %v393, 4294901760
          %v395 = vsub.f32 %v393, %v394
          %v396 = vand.u32 %v395, 4294901760
          %397 = vmatpush1.msra.mxu0 %v396
          %398 = vmatprep.subr.mxu0 0.0
          %v399 = vand.u32 %v273, 4294901760
          %v400 = vsub.f32 %v273, %v399
          %v401 = vand.u32 %v400, 4294901760
          %v402 = vsub.f32 %v400, %v401
          %v403 = vand.u32 %v402, 4294901760
          %404 = vmatpush1.msra.mxu0 %v403
          %405 = vmatprep.subr.mxu0 0.0
          %v406 = vand.u32 %v272, 4294901760
          %v407 = vsub.f32 %v272, %v406
          %v408 = vand.u32 %v407, 4294901760
          %v409 = vsub.f32 %v407, %v408
          %v410 = vand.u32 %v409, 4294901760
          %411 = vmatpush1.msra.mxu0 %v410
          %412 = vmatprep.subr.mxu0 0.0
          %v413 = vand.u32 %v271, 4294901760
          %v414 = vsub.f32 %v271, %v413
          %v415 = vand.u32 %v414, 4294901760
          %v416 = vsub.f32 %v414, %v415
          %v417 = vand.u32 %v416, 4294901760
          %418 = vmatpush1.msra.mxu0 %v417
          %419 = vmatprep.subr.mxu0 0.0
          %420 = vmatpush2.msra.mxu0 0.0
          %421 = vmatprep.subr.mxu0 0.0
          %422 = vmatpush2.msra.mxu0 0.0
          %423 = vmatprep.subr.mxu0 0.0
          %424 = vmatpush2.msra.mxu0 0.0
          %425 = vmatprep.subr.mxu0 0.0
          %426 = vmatpush2.msra.mxu0 0.0
          %427 = vmatprep.subr.mxu0 0.0
          %428 = vmatpush2.msra.mxu0 0.0
          %429 = vmatprep.subr.mxu0 0.0
          %430 = vmatpush2.msra.mxu0 0.0
          %431 = vmatprep.subr.mxu0 0.0
          %432 = vmatpush2.msra.mxu0 0.0
          %433 = vmatprep.subr.mxu0 0.0
          %434 = vmatpush2.msra.mxu0 0.0
          %435 = vmatprep.subr.mxu0 0.0
          %436 = vmatpush2.msra.mxu0 0.0
          %437 = vmatprep.subr.mxu0 0.0
          %438 = vmatpush2.msra.mxu0 0.0
          %439 = vmatprep.subr.mxu0 0.0
          %440 = vmatpush2.msra.mxu0 0.0
          %441 = vmatprep.subr.mxu0 0.0
          %442 = vmatpush2.msra.mxu0 0.0
          %443 = vmatprep.subr.mxu0 0.0
          %444 = vmatpush2.msra.mxu0 0.0
          %445 = vmatprep.subr.mxu0 0.0
          %446 = vmatpush2.msra.mxu0 0.0
          %447 = vmatprep.subr.mxu0 0.0
          %448 = vmatpush2.msra.mxu0 0.0
          %449 = vmatprep.subr.mxu0 0.0
          %450 = vmatpush2.msra.mxu0 0.0
          %451 = vmatprep.mubr.f32.mxu0 0.0
          %v452 = vand.u32 %v286, 4294901760
          %453 = vmatmul.mubr.f32.gmra.mxu0 %v452
          %v454 = vpop.f32.mrf.mxu0
          %v455 = vadd.f32 %v364, %v454
          %v456 = vpop.f32.mrf.mxu0
          %457 = vdwg.mxu0
          %458 = vmatprep.subr.mxu0 0.0
          %459 = vmatpush1.msra.mxu0 0.0
          %460 = vmatprep.subr.mxu0 0.0
          %461 = vmatpush1.msra.mxu0 0.0
          %462 = vmatprep.subr.mxu0 0.0
          %463 = vmatpush1.msra.mxu0 0.0
          %464 = vmatprep.subr.mxu0 0.0
          %465 = vmatpush1.msra.mxu0 0.0
          %466 = vmatprep.subr.mxu0 0.0
          %467 = vmatpush1.msra.mxu0 0.0
          %468 = vmatprep.subr.mxu0 0.0
          %469 = vmatpush1.msra.mxu0 0.0
          %470 = vmatprep.subr.mxu0 0.0
          %471 = vmatpush1.msra.mxu0 0.0
          %472 = vmatprep.subr.mxu0 0.0
          %473 = vmatpush1.msra.mxu0 0.0
          %474 = vmatprep.subr.mxu0 0.0
          %475 = vmatpush1.msra.mxu0 0.0
          %476 = vmatprep.subr.mxu0 0.0
          %477 = vmatpush1.msra.mxu0 0.0
          %478 = vmatprep.subr.mxu0 0.0
          %479 = vmatpush1.msra.mxu0 0.0
          %480 = vmatprep.subr.mxu0 0.0
          %481 = vmatpush1.msra.mxu0 0.0
          %482 = vmatprep.subr.mxu0 0.0
          %v483 = vand.u32 %v274, 4294901760
          %v484 = vsub.f32 %v274, %v483
          %485 = vmatpush1.msra.mxu0 %v484
          %486 = vmatprep.subr.mxu0 0.0
          %v487 = vand.u32 %v273, 4294901760
          %v488 = vsub.f32 %v273, %v487
          %489 = vmatpush1.msra.mxu0 %v488
          %490 = vmatprep.subr.mxu0 0.0
          %v491 = vand.u32 %v272, 4294901760
          %v492 = vsub.f32 %v272, %v491
          %493 = vmatpush1.msra.mxu0 %v492
          %494 = vmatprep.subr.mxu0 0.0
          %v495 = vand.u32 %v271, 4294901760
          %v496 = vsub.f32 %v271, %v495
          %497 = vmatpush1.msra.mxu0 %v496
          %498 = vmatprep.subr.mxu0 0.0
          %499 = vmatpush2.msra.mxu0 0.0
          %500 = vmatprep.subr.mxu0 0.0
          %501 = vmatpush2.msra.mxu0 0.0
          %502 = vmatprep.subr.mxu0 0.0
          %503 = vmatpush2.msra.mxu0 0.0
          %504 = vmatprep.subr.mxu0 0.0
          %505 = vmatpush2.msra.mxu0 0.0
          %506 = vmatprep.subr.mxu0 0.0
          %507 = vmatpush2.msra.mxu0 0.0
          %508 = vmatprep.subr.mxu0 0.0
          %509 = vmatpush2.msra.mxu0 0.0
          %510 = vmatprep.subr.mxu0 0.0
          %511 = vmatpush2.msra.mxu0 0.0
          %512 = vmatprep.subr.mxu0 0.0
          %513 = vmatpush2.msra.mxu0 0.0
          %514 = vmatprep.subr.mxu0 0.0
          %515 = vmatpush2.msra.mxu0 0.0
          %516 = vmatprep.subr.mxu0 0.0
          %517 = vmatpush2.msra.mxu0 0.0
          %518 = vmatprep.subr.mxu0 0.0
          %519 = vmatpush2.msra.mxu0 0.0
          %520 = vmatprep.subr.mxu0 0.0
          %521 = vmatpush2.msra.mxu0 0.0
          %522 = vmatprep.subr.mxu0 0.0
          %523 = vmatpush2.msra.mxu0 0.0
          %524 = vmatprep.subr.mxu0 0.0
          %525 = vmatpush2.msra.mxu0 0.0
          %526 = vmatprep.subr.mxu0 0.0
          %527 = vmatpush2.msra.mxu0 0.0
          %528 = vmatprep.subr.mxu0 0.0
          %529 = vmatpush2.msra.mxu0 0.0
          %530 = vmatprep.mubr.f32.mxu0 0.0
          %v531 = vand.u32 %v286, 4294901760
          %v532 = vsub.f32 %v286, %v531
          %533 = vmatmul.mubr.f32.gmra.mxu0 %v532
          %v534 = vpop.f32.mrf.mxu0
          %v535 = vadd.f32 %v455, %v534
          %v536 = vpop.f32.mrf.mxu0
          %537 = vdwg.mxu0
          %538 = vmatprep.subr.mxu0 0.0
          %539 = vmatpush1.msra.mxu0 0.0
          %540 = vmatprep.subr.mxu0 0.0
          %541 = vmatpush1.msra.mxu0 0.0
          %542 = vmatprep.subr.mxu0 0.0
          %543 = vmatpush1.msra.mxu0 0.0
          %544 = vmatprep.subr.mxu0 0.0
          %545 = vmatpush1.msra.mxu0 0.0
          %546 = vmatprep.subr.mxu0 0.0
          %547 = vmatpush1.msra.mxu0 0.0
          %548 = vmatprep.subr.mxu0 0.0
          %549 = vmatpush1.msra.mxu0 0.0
          %550 = vmatprep.subr.mxu0 0.0
          %551 = vmatpush1.msra.mxu0 0.0
          %552 = vmatprep.subr.mxu0 0.0
          %553 = vmatpush1.msra.mxu0 0.0
          %554 = vmatprep.subr.mxu0 0.0
          %555 = vmatpush1.msra.mxu0 0.0
          %556 = vmatprep.subr.mxu0 0.0
          %557 = vmatpush1.msra.mxu0 0.0
          %558 = vmatprep.subr.mxu0 0.0
          %559 = vmatpush1.msra.mxu0 0.0
          %560 = vmatprep.subr.mxu0 0.0
          %561 = vmatpush1.msra.mxu0 0.0
          %562 = vmatprep.subr.mxu0 0.0
          %v563 = vand.u32 %v274, 4294901760
          %564 = vmatpush1.msra.mxu0 %v563
          %565 = vmatprep.subr.mxu0 0.0
          %v566 = vand.u32 %v273, 4294901760
          %567 = vmatpush1.msra.mxu0 %v566
          %568 = vmatprep.subr.mxu0 0.0
          %v569 = vand.u32 %v272, 4294901760
          %570 = vmatpush1.msra.mxu0 %v569
          %571 = vmatprep.subr.mxu0 0.0
          %v572 = vand.u32 %v271, 4294901760
          %573 = vmatpush1.msra.mxu0 %v572
          %574 = vmatprep.subr.mxu0 0.0
          %575 = vmatpush2.msra.mxu0 0.0
          %576 = vmatprep.subr.mxu0 0.0
          %577 = vmatpush2.msra.mxu0 0.0
          %578 = vmatprep.subr.mxu0 0.0
          %579 = vmatpush2.msra.mxu0 0.0
          %580 = vmatprep.subr.mxu0 0.0
          %581 = vmatpush2.msra.mxu0 0.0
          %582 = vmatprep.subr.mxu0 0.0
          %583 = vmatpush2.msra.mxu0 0.0
          %584 = vmatprep.subr.mxu0 0.0
          %585 = vmatpush2.msra.mxu0 0.0
          %586 = vmatprep.subr.mxu0 0.0
          %587 = vmatpush2.msra.mxu0 0.0
          %588 = vmatprep.subr.mxu0 0.0
          %589 = vmatpush2.msra.mxu0 0.0
          %590 = vmatprep.subr.mxu0 0.0
          %591 = vmatpush2.msra.mxu0 0.0
          %592 = vmatprep.subr.mxu0 0.0
          %593 = vmatpush2.msra.mxu0 0.0
          %594 = vmatprep.subr.mxu0 0.0
          %595 = vmatpush2.msra.mxu0 0.0
          %596 = vmatprep.subr.mxu0 0.0
          %597 = vmatpush2.msra.mxu0 0.0
          %598 = vmatprep.subr.mxu0 0.0
          %599 = vmatpush2.msra.mxu0 0.0
          %600 = vmatprep.subr.mxu0 0.0
          %601 = vmatpush2.msra.mxu0 0.0
          %602 = vmatprep.subr.mxu0 0.0
          %603 = vmatpush2.msra.mxu0 0.0
          %604 = vmatprep.subr.mxu0 0.0
          %605 = vmatpush2.msra.mxu0 0.0
          %606 = vmatprep.mubr.f32.mxu0 0.0
          %v607 = vand.u32 %v286, 4294901760
          %v608 = vsub.f32 %v286, %v607
          %v609 = vand.u32 %v608, 4294901760
          %610 = vmatmul.mubr.f32.gmra.mxu0 %v609
          %v611 = vpop.f32.mrf.mxu0
          %v612 = vadd.f32 %v535, %v611
          %v613 = vpop.f32.mrf.mxu0
          %614 = vdwg.mxu0
          %615 = vmatprep.subr.mxu0 0.0
          %616 = vmatpush1.msra.mxu0 0.0
          %617 = vmatprep.subr.mxu0 0.0
          %618 = vmatpush1.msra.mxu0 0.0
          %619 = vmatprep.subr.mxu0 0.0
          %620 = vmatpush1.msra.mxu0 0.0
          %621 = vmatprep.subr.mxu0 0.0
          %622 = vmatpush1.msra.mxu0 0.0
          %623 = vmatprep.subr.mxu0 0.0
          %624 = vmatpush1.msra.mxu0 0.0
          %625 = vmatprep.subr.mxu0 0.0
          %626 = vmatpush1.msra.mxu0 0.0
          %627 = vmatprep.subr.mxu0 0.0
          %628 = vmatpush1.msra.mxu0 0.0
          %629 = vmatprep.subr.mxu0 0.0
          %630 = vmatpush1.msra.mxu0 0.0
          %631 = vmatprep.subr.mxu0 0.0
          %632 = vmatpush1.msra.mxu0 0.0
          %633 = vmatprep.subr.mxu0 0.0
          %634 = vmatpush1.msra.mxu0 0.0
          %635 = vmatprep.subr.mxu0 0.0
          %636 = vmatpush1.msra.mxu0 0.0
          %637 = vmatprep.subr.mxu0 0.0
          %638 = vmatpush1.msra.mxu0 0.0
          %639 = vmatprep.subr.mxu0 0.0
          %v640 = vand.u32 %v274, 4294901760
          %v641 = vsub.f32 %v274, %v640
          %v642 = vand.u32 %v641, 4294901760
          %643 = vmatpush1.msra.mxu0 %v642
          %644 = vmatprep.subr.mxu0 0.0
          %v645 = vand.u32 %v273, 4294901760
          %v646 = vsub.f32 %v273, %v645
          %v647 = vand.u32 %v646, 4294901760
          %648 = vmatpush1.msra.mxu0 %v647
          %649 = vmatprep.subr.mxu0 0.0
          %v650 = vand.u32 %v272, 4294901760
          %v651 = vsub.f32 %v272, %v650
          %v652 = vand.u32 %v651, 4294901760
          %653 = vmatpush1.msra.mxu0 %v652
          %654 = vmatprep.subr.mxu0 0.0
          %v655 = vand.u32 %v271, 4294901760
          %v656 = vsub.f32 %v271, %v655
          %v657 = vand.u32 %v656, 4294901760
          %658 = vmatpush1.msra.mxu0 %v657
          %659 = vmatprep.subr.mxu0 0.0
          %660 = vmatpush2.msra.mxu0 0.0
          %661 = vmatprep.subr.mxu0 0.0
          %662 = vmatpush2.msra.mxu0 0.0
          %663 = vmatprep.subr.mxu0 0.0
          %664 = vmatpush2.msra.mxu0 0.0
          %665 = vmatprep.subr.mxu0 0.0
          %666 = vmatpush2.msra.mxu0 0.0
          %667 = vmatprep.subr.mxu0 0.0
          %668 = vmatpush2.msra.mxu0 0.0
          %669 = vmatprep.subr.mxu0 0.0
          %670 = vmatpush2.msra.mxu0 0.0
          %671 = vmatprep.subr.mxu0 0.0
          %672 = vmatpush2.msra.mxu0 0.0
          %673 = vmatprep.subr.mxu0 0.0
          %674 = vmatpush2.msra.mxu0 0.0
          %675 = vmatprep.subr.mxu0 0.0
          %676 = vmatpush2.msra.mxu0 0.0
          %677 = vmatprep.subr.mxu0 0.0
          %678 = vmatpush2.msra.mxu0 0.0
          %679 = vmatprep.subr.mxu0 0.0
          %680 = vmatpush2.msra.mxu0 0.0
          %681 = vmatprep.subr.mxu0 0.0
          %682 = vmatpush2.msra.mxu0 0.0
          %683 = vmatprep.subr.mxu0 0.0
          %684 = vmatpush2.msra.mxu0 0.0
          %685 = vmatprep.subr.mxu0 0.0
          %686 = vmatpush2.msra.mxu0 0.0
          %687 = vmatprep.subr.mxu0 0.0
          %688 = vmatpush2.msra.mxu0 0.0
          %689 = vmatprep.subr.mxu0 0.0
          %690 = vmatpush2.msra.mxu0 0.0
          %691 = vmatprep.mubr.f32.mxu0 0.0
          %v692 = vand.u32 %v286, 4294901760
          %693 = vmatmul.mubr.f32.gmra.mxu0 %v692
          %v694 = vpop.f32.mrf.mxu0
          %v695 = vadd.f32 %v612, %v694
          %v696 = vpop.f32.mrf.mxu0
          %697 = vdwg.mxu0
          %698 = vmatprep.subr.mxu0 0.0
          %699 = vmatpush1.msra.mxu0 0.0
          %700 = vmatprep.subr.mxu0 0.0
          %701 = vmatpush1.msra.mxu0 0.0
          %702 = vmatprep.subr.mxu0 0.0
          %703 = vmatpush1.msra.mxu0 0.0
          %704 = vmatprep.subr.mxu0 0.0
          %705 = vmatpush1.msra.mxu0 0.0
          %706 = vmatprep.subr.mxu0 0.0
          %707 = vmatpush1.msra.mxu0 0.0
          %708 = vmatprep.subr.mxu0 0.0
          %709 = vmatpush1.msra.mxu0 0.0
          %710 = vmatprep.subr.mxu0 0.0
          %711 = vmatpush1.msra.mxu0 0.0
          %712 = vmatprep.subr.mxu0 0.0
          %713 = vmatpush1.msra.mxu0 0.0
          %714 = vmatprep.subr.mxu0 0.0
          %715 = vmatpush1.msra.mxu0 0.0
          %716 = vmatprep.subr.mxu0 0.0
          %717 = vmatpush1.msra.mxu0 0.0
          %718 = vmatprep.subr.mxu0 0.0
          %719 = vmatpush1.msra.mxu0 0.0
          %720 = vmatprep.subr.mxu0 0.0
          %721 = vmatpush1.msra.mxu0 0.0
          %722 = vmatprep.subr.mxu0 0.0
          %v723 = vand.u32 %v274, 4294901760
          %724 = vmatpush1.msra.mxu0 %v723
          %725 = vmatprep.subr.mxu0 0.0
          %v726 = vand.u32 %v273, 4294901760
          %727 = vmatpush1.msra.mxu0 %v726
          %728 = vmatprep.subr.mxu0 0.0
          %v729 = vand.u32 %v272, 4294901760
          %730 = vmatpush1.msra.mxu0 %v729
          %731 = vmatprep.subr.mxu0 0.0
          %v732 = vand.u32 %v271, 4294901760
          %733 = vmatpush1.msra.mxu0 %v732
          %734 = vmatprep.subr.mxu0 0.0
          %735 = vmatpush2.msra.mxu0 0.0
          %736 = vmatprep.subr.mxu0 0.0
          %737 = vmatpush2.msra.mxu0 0.0
          %738 = vmatprep.subr.mxu0 0.0
          %739 = vmatpush2.msra.mxu0 0.0
          %740 = vmatprep.subr.mxu0 0.0
          %741 = vmatpush2.msra.mxu0 0.0
          %742 = vmatprep.subr.mxu0 0.0
          %743 = vmatpush2.msra.mxu0 0.0
          %744 = vmatprep.subr.mxu0 0.0
          %745 = vmatpush2.msra.mxu0 0.0
          %746 = vmatprep.subr.mxu0 0.0
          %747 = vmatpush2.msra.mxu0 0.0
          %748 = vmatprep.subr.mxu0 0.0
          %749 = vmatpush2.msra.mxu0 0.0
          %750 = vmatprep.subr.mxu0 0.0
          %751 = vmatpush2.msra.mxu0 0.0
          %752 = vmatprep.subr.mxu0 0.0
          %753 = vmatpush2.msra.mxu0 0.0
          %754 = vmatprep.subr.mxu0 0.0
          %755 = vmatpush2.msra.mxu0 0.0
          %756 = vmatprep.subr.mxu0 0.0
          %757 = vmatpush2.msra.mxu0 0.0
          %758 = vmatprep.subr.mxu0 0.0
          %759 = vmatpush2.msra.mxu0 0.0
          %760 = vmatprep.subr.mxu0 0.0
          %761 = vmatpush2.msra.mxu0 0.0
          %762 = vmatprep.subr.mxu0 0.0
          %763 = vmatpush2.msra.mxu0 0.0
          %764 = vmatprep.subr.mxu0 0.0
          %765 = vmatpush2.msra.mxu0 0.0
          %766 = vmatprep.mubr.f32.mxu0 0.0
          %v767 = vand.u32 %v286, 4294901760
          %768 = vmatmul.mubr.f32.gmra.mxu0 %v767
          %v769 = vpop.f32.mrf.mxu0
          %v770 = vadd.f32 %v695, %v769
          %v771 = vpop.f32.mrf.mxu0
          %772 = vdwg.mxu0
          %v773 = vmax.f32 %v770, 0.0
          %v774 = vld [vmem:[%s2] sm:$0xff]
          %v775 = vld [vmem:[%s2 + $0x8] sm:$0xff]
          %v776 = vld [vmem:[%s2 + $0x10] sm:$0xff]
          %v777 = vld [vmem:[%s2 + $0x18] sm:$0xff]
          %778 = vmatprep.subr.mxu0 0.0
          %779 = vmatpush1.msra.mxu0 0.0
          %780 = vmatprep.subr.mxu0 0.0
          %781 = vmatpush1.msra.mxu0 0.0
          %782 = vmatprep.subr.mxu0 0.0
          %783 = vmatpush1.msra.mxu0 0.0
          %784 = vmatprep.subr.mxu0 0.0
          %785 = vmatpush1.msra.mxu0 0.0
          %786 = vmatprep.subr.mxu0 0.0
          %787 = vmatpush1.msra.mxu0 0.0
          %788 = vmatprep.subr.mxu0 0.0
          %789 = vmatpush1.msra.mxu0 0.0
          %790 = vmatprep.subr.mxu0 0.0
          %791 = vmatpush1.msra.mxu0 0.0
          %792 = vmatprep.subr.mxu0 0.0
          %793 = vmatpush1.msra.mxu0 0.0
          %794 = vmatprep.subr.mxu0 0.0
          %795 = vmatpush1.msra.mxu0 0.0
          %796 = vmatprep.subr.mxu0 0.0
          %797 = vmatpush1.msra.mxu0 0.0
          %798 = vmatprep.subr.mxu0 0.0
          %799 = vmatpush1.msra.mxu0 0.0
          %800 = vmatprep.subr.mxu0 0.0
          %801 = vmatpush1.msra.mxu0 0.0
          %802 = vmatprep.subr.mxu0 0.0
          %v803 = vand.u32 %v282, 4294901760
          %804 = vmatpush1.msra.mxu0 %v803
          %805 = vmatprep.subr.mxu0 0.0
          %v806 = vand.u32 %v280, 4294901760
          %807 = vmatpush1.msra.mxu0 %v806
          %808 = vmatprep.subr.mxu0 0.0
          %v809 = vand.u32 %v278, 4294901760
          %810 = vmatpush1.msra.mxu0 %v809
          %811 = vmatprep.subr.mxu0 0.0
          %v812 = vand.u32 %v276, 4294901760
          %813 = vmatpush1.msra.mxu0 %v812
          %814 = vmatprep.subr.mxu0 0.0
          %815 = vmatpush2.msra.mxu0 0.0
          %816 = vmatprep.subr.mxu0 0.0
          %817 = vmatpush2.msra.mxu0 0.0
          %818 = vmatprep.subr.mxu0 0.0
          %819 = vmatpush2.msra.mxu0 0.0
          %820 = vmatprep.subr.mxu0 0.0
          %821 = vmatpush2.msra.mxu0 0.0
          %822 = vmatprep.subr.mxu0 0.0
          %823 = vmatpush2.msra.mxu0 0.0
          %824 = vmatprep.subr.mxu0 0.0
          %825 = vmatpush2.msra.mxu0 0.0
          %826 = vmatprep.subr.mxu0 0.0
          %827 = vmatpush2.msra.mxu0 0.0
          %828 = vmatprep.subr.mxu0 0.0
          %829 = vmatpush2.msra.mxu0 0.0
          %830 = vmatprep.subr.mxu0 0.0
          %831 = vmatpush2.msra.mxu0 0.0
          %832 = vmatprep.subr.mxu0 0.0
          %833 = vmatpush2.msra.mxu0 0.0
          %834 = vmatprep.subr.mxu0 0.0
          %835 = vmatpush2.msra.mxu0 0.0
          %836 = vmatprep.subr.mxu0 0.0
          %837 = vmatpush2.msra.mxu0 0.0
          %838 = vmatprep.subr.mxu0 0.0
          %839 = vmatpush2.msra.mxu0 0.0
          %840 = vmatprep.subr.mxu0 0.0
          %841 = vmatpush2.msra.mxu0 0.0
          %842 = vmatprep.subr.mxu0 0.0
          %843 = vmatpush2.msra.mxu0 0.0
          %844 = vmatprep.subr.mxu0 0.0
          %845 = vmatpush2.msra.mxu0 0.0
          %846 = vmatprep.mubr.f32.mxu0 0.0
          %v847 = vand.u32 %v286, 4294901760
          %v848 = vsub.f32 %v286, %v847
          %v849 = vand.u32 %v848, 4294901760
          %v850 = vsub.f32 %v848, %v849
          %v851 = vand.u32 %v850, 4294901760
          %852 = vmatmul.mubr.f32.gmra.mxu0 %v851
          %v853 = vpop.f32.mrf.mxu0
          %v854 = vadd.f32 0.0, %v853
          %v855 = vpop.f32.mrf.mxu0
          %856 = vdwg.mxu0
          %857 = vmatprep.subr.mxu0 0.0
          %858 = vmatpush1.msra.mxu0 0.0
          %859 = vmatprep.subr.mxu0 0.0
          %860 = vmatpush1.msra.mxu0 0.0
          %861 = vmatprep.subr.mxu0 0.0
          %862 = vmatpush1.msra.mxu0 0.0
          %863 = vmatprep.subr.mxu0 0.0
          %864 = vmatpush1.msra.mxu0 0.0
          %865 = vmatprep.subr.mxu0 0.0
          %866 = vmatpush1.msra.mxu0 0.0
          %867 = vmatprep.subr.mxu0 0.0
          %868 = vmatpush1.msra.mxu0 0.0
          %869 = vmatprep.subr.mxu0 0.0
          %870 = vmatpush1.msra.mxu0 0.0
          %871 = vmatprep.subr.mxu0 0.0
          %872 = vmatpush1.msra.mxu0 0.0
          %873 = vmatprep.subr.mxu0 0.0
          %874 = vmatpush1.msra.mxu0 0.0
          %875 = vmatprep.subr.mxu0 0.0
          %876 = vmatpush1.msra.mxu0 0.0
          %877 = vmatprep.subr.mxu0 0.0
          %878 = vmatpush1.msra.mxu0 0.0
          %879 = vmatprep.subr.mxu0 0.0
          %880 = vmatpush1.msra.mxu0 0.0
          %881 = vmatprep.subr.mxu0 0.0
          %v882 = vand.u32 %v282, 4294901760
          %v883 = vsub.f32 %v282, %v882
          %v884 = vand.u32 %v883, 4294901760
          %v885 = vsub.f32 %v883, %v884
          %v886 = vand.u32 %v885, 4294901760
          %887 = vmatpush1.msra.mxu0 %v886
          %888 = vmatprep.subr.mxu0 0.0
          %v889 = vand.u32 %v280, 4294901760
          %v890 = vsub.f32 %v280, %v889
          %v891 = vand.u32 %v890, 4294901760
          %v892 = vsub.f32 %v890, %v891
          %v893 = vand.u32 %v892, 4294901760
          %894 = vmatpush1.msra.mxu0 %v893
          %895 = vmatprep.subr.mxu0 0.0
          %v896 = vand.u32 %v278, 4294901760
          %v897 = vsub.f32 %v278, %v896
          %v898 = vand.u32 %v897, 4294901760
          %v899 = vsub.f32 %v897, %v898
          %v900 = vand.u32 %v899, 4294901760
          %901 = vmatpush1.msra.mxu0 %v900
          %902 = vmatprep.subr.mxu0 0.0
          %v903 = vand.u32 %v276, 4294901760
          %v904 = vsub.f32 %v276, %v903
          %v905 = vand.u32 %v904, 4294901760
          %v906 = vsub.f32 %v904, %v905
          %v907 = vand.u32 %v906, 4294901760
          %908 = vmatpush1.msra.mxu0 %v907
          %909 = vmatprep.subr.mxu0 0.0
          %910 = vmatpush2.msra.mxu0 0.0
          %911 = vmatprep.subr.mxu0 0.0
          %912 = vmatpush2.msra.mxu0 0.0
          %913 = vmatprep.subr.mxu0 0.0
          %914 = vmatpush2.msra.mxu0 0.0
          %915 = vmatprep.subr.mxu0 0.0
          %916 = vmatpush2.msra.mxu0 0.0
          %917 = vmatprep.subr.mxu0 0.0
          %918 = vmatpush2.msra.mxu0 0.0
          %919 = vmatprep.subr.mxu0 0.0
          %920 = vmatpush2.msra.mxu0 0.0
          %921 = vmatprep.subr.mxu0 0.0
          %922 = vmatpush2.msra.mxu0 0.0
          %923 = vmatprep.subr.mxu0 0.0
          %924 = vmatpush2.msra.mxu0 0.0
          %925 = vmatprep.subr.mxu0 0.0
          %926 = vmatpush2.msra.mxu0 0.0
          %927 = vmatprep.subr.mxu0 0.0
          %928 = vmatpush2.msra.mxu0 0.0
          %929 = vmatprep.subr.mxu0 0.0
          %930 = vmatpush2.msra.mxu0 0.0
          %931 = vmatprep.subr.mxu0 0.0
          %932 = vmatpush2.msra.mxu0 0.0
          %933 = vmatprep.subr.mxu0 0.0
          %934 = vmatpush2.msra.mxu0 0.0
          %935 = vmatprep.subr.mxu0 0.0
          %936 = vmatpush2.msra.mxu0 0.0
          %937 = vmatprep.subr.mxu0 0.0
          %938 = vmatpush2.msra.mxu0 0.0
          %939 = vmatprep.subr.mxu0 0.0
          %940 = vmatpush2.msra.mxu0 0.0
          %941 = vmatprep.mubr.f32.mxu0 0.0
          %v942 = vand.u32 %v286, 4294901760
          %943 = vmatmul.mubr.f32.gmra.mxu0 %v942
          %v944 = vpop.f32.mrf.mxu0
          %v945 = vadd.f32 %v854, %v944
          %v946 = vpop.f32.mrf.mxu0
          %947 = vdwg.mxu0
          %948 = vmatprep.subr.mxu0 0.0
          %949 = vmatpush1.msra.mxu0 0.0
          %950 = vmatprep.subr.mxu0 0.0
          %951 = vmatpush1.msra.mxu0 0.0
          %952 = vmatprep.subr.mxu0 0.0
          %953 = vmatpush1.msra.mxu0 0.0
          %954 = vmatprep.subr.mxu0 0.0
          %955 = vmatpush1.msra.mxu0 0.0
          %956 = vmatprep.subr.mxu0 0.0
          %957 = vmatpush1.msra.mxu0 0.0
          %958 = vmatprep.subr.mxu0 0.0
          %959 = vmatpush1.msra.mxu0 0.0
          %960 = vmatprep.subr.mxu0 0.0
          %961 = vmatpush1.msra.mxu0 0.0
          %962 = vmatprep.subr.mxu0 0.0
          %963 = vmatpush1.msra.mxu0 0.0
          %964 = vmatprep.subr.mxu0 0.0
          %965 = vmatpush1.msra.mxu0 0.0
          %966 = vmatprep.subr.mxu0 0.0
          %967 = vmatpush1.msra.mxu0 0.0
          %968 = vmatprep.subr.mxu0 0.0
          %969 = vmatpush1.msra.mxu0 0.0
          %970 = vmatprep.subr.mxu0 0.0
          %971 = vmatpush1.msra.mxu0 0.0
          %972 = vmatprep.subr.mxu0 0.0
          %v973 = vand.u32 %v282, 4294901760
          %v974 = vsub.f32 %v282, %v973
          %975 = vmatpush1.msra.mxu0 %v974
          %976 = vmatprep.subr.mxu0 0.0
          %v977 = vand.u32 %v280, 4294901760
          %v978 = vsub.f32 %v280, %v977
          %979 = vmatpush1.msra.mxu0 %v978
          %980 = vmatprep.subr.mxu0 0.0
          %v981 = vand.u32 %v278, 4294901760
          %v982 = vsub.f32 %v278, %v981
          %983 = vmatpush1.msra.mxu0 %v982
          %984 = vmatprep.subr.mxu0 0.0
          %v985 = vand.u32 %v276, 4294901760
          %v986 = vsub.f32 %v276, %v985
          %987 = vmatpush1.msra.mxu0 %v986
          %988 = vmatprep.subr.mxu0 0.0
          %989 = vmatpush2.msra.mxu0 0.0
          %990 = vmatprep.subr.mxu0 0.0
          %991 = vmatpush2.msra.mxu0 0.0
          %992 = vmatprep.subr.mxu0 0.0
          %993 = vmatpush2.msra.mxu0 0.0
          %994 = vmatprep.subr.mxu0 0.0
          %995 = vmatpush2.msra.mxu0 0.0
          %996 = vmatprep.subr.mxu0 0.0
          %997 = vmatpush2.msra.mxu0 0.0
          %998 = vmatprep.subr.mxu0 0.0
          %999 = vmatpush2.msra.mxu0 0.0
          %1000 = vmatprep.subr.mxu0 0.0
          %1001 = vmatpush2.msra.mxu0 0.0
          %1002 = vmatprep.subr.mxu0 0.0
          %1003 = vmatpush2.msra.mxu0 0.0
          %1004 = vmatprep.subr.mxu0 0.0
          %1005 = vmatpush2.msra.mxu0 0.0
          %1006 = vmatprep.subr.mxu0 0.0
          %1007 = vmatpush2.msra.mxu0 0.0
          %1008 = vmatprep.subr.mxu0 0.0
          %1009 = vmatpush2.msra.mxu0 0.0
          %1010 = vmatprep.subr.mxu0 0.0
          %1011 = vmatpush2.msra.mxu0 0.0
          %1012 = vmatprep.subr.mxu0 0.0
          %1013 = vmatpush2.msra.mxu0 0.0
          %1014 = vmatprep.subr.mxu0 0.0
          %1015 = vmatpush2.msra.mxu0 0.0
          %1016 = vmatprep.subr.mxu0 0.0
          %1017 = vmatpush2.msra.mxu0 0.0
          %1018 = vmatprep.subr.mxu0 0.0
          %1019 = vmatpush2.msra.mxu0 0.0
          %1020 = vmatprep.mubr.f32.mxu0 0.0
          %v1021 = vand.u32 %v286, 4294901760
          %v1022 = vsub.f32 %v286, %v1021
          %1023 = vmatmul.mubr.f32.gmra.mxu0 %v1022
          %v1024 = vpop.f32.mrf.mxu0
          %v1025 = vadd.f32 %v945, %v1024
          %v1026 = vpop.f32.mrf.mxu0
          %1027 = vdwg.mxu0
          %1028 = vmatprep.subr.mxu0 0.0
          %1029 = vmatpush1.msra.mxu0 0.0
          %1030 = vmatprep.subr.mxu0 0.0
          %1031 = vmatpush1.msra.mxu0 0.0
          %1032 = vmatprep.subr.mxu0 0.0
          %1033 = vmatpush1.msra.mxu0 0.0
          %1034 = vmatprep.subr.mxu0 0.0
          %1035 = vmatpush1.msra.mxu0 0.0
          %1036 = vmatprep.subr.mxu0 0.0
          %1037 = vmatpush1.msra.mxu0 0.0
          %1038 = vmatprep.subr.mxu0 0.0
          %1039 = vmatpush1.msra.mxu0 0.0
          %1040 = vmatprep.subr.mxu0 0.0
          %1041 = vmatpush1.msra.mxu0 0.0
          %1042 = vmatprep.subr.mxu0 0.0
          %1043 = vmatpush1.msra.mxu0 0.0
          %1044 = vmatprep.subr.mxu0 0.0
          %1045 = vmatpush1.msra.mxu0 0.0
          %1046 = vmatprep.subr.mxu0 0.0
          %1047 = vmatpush1.msra.mxu0 0.0
          %1048 = vmatprep.subr.mxu0 0.0
          %1049 = vmatpush1.msra.mxu0 0.0
          %1050 = vmatprep.subr.mxu0 0.0
          %1051 = vmatpush1.msra.mxu0 0.0
          %1052 = vmatprep.subr.mxu0 0.0
          %v1053 = vand.u32 %v282, 4294901760
          %1054 = vmatpush1.msra.mxu0 %v1053
          %1055 = vmatprep.subr.mxu0 0.0
          %v1056 = vand.u32 %v280, 4294901760
          %1057 = vmatpush1.msra.mxu0 %v1056
          %1058 = vmatprep.subr.mxu0 0.0
          %v1059 = vand.u32 %v278, 4294901760
          %1060 = vmatpush1.msra.mxu0 %v1059
          %1061 = vmatprep.subr.mxu0 0.0
          %v1062 = vand.u32 %v276, 4294901760
          %1063 = vmatpush1.msra.mxu0 %v1062
          %1064 = vmatprep.subr.mxu0 0.0
          %1065 = vmatpush2.msra.mxu0 0.0
          %1066 = vmatprep.subr.mxu0 0.0
          %1067 = vmatpush2.msra.mxu0 0.0
          %1068 = vmatprep.subr.mxu0 0.0
          %1069 = vmatpush2.msra.mxu0 0.0
          %1070 = vmatprep.subr.mxu0 0.0
          %1071 = vmatpush2.msra.mxu0 0.0
          %1072 = vmatprep.subr.mxu0 0.0
          %1073 = vmatpush2.msra.mxu0 0.0
          %1074 = vmatprep.subr.mxu0 0.0
          %1075 = vmatpush2.msra.mxu0 0.0
          %1076 = vmatprep.subr.mxu0 0.0
          %1077 = vmatpush2.msra.mxu0 0.0
          %1078 = vmatprep.subr.mxu0 0.0
          %1079 = vmatpush2.msra.mxu0 0.0
          %1080 = vmatprep.subr.mxu0 0.0
          %1081 = vmatpush2.msra.mxu0 0.0
          %1082 = vmatprep.subr.mxu0 0.0
          %1083 = vmatpush2.msra.mxu0 0.0
          %1084 = vmatprep.subr.mxu0 0.0
          %1085 = vmatpush2.msra.mxu0 0.0
          %1086 = vmatprep.subr.mxu0 0.0
          %1087 = vmatpush2.msra.mxu0 0.0
          %1088 = vmatprep.subr.mxu0 0.0
          %1089 = vmatpush2.msra.mxu0 0.0
          %1090 = vmatprep.subr.mxu0 0.0
          %1091 = vmatpush2.msra.mxu0 0.0
          %1092 = vmatprep.subr.mxu0 0.0
          %1093 = vmatpush2.msra.mxu0 0.0
          %1094 = vmatprep.subr.mxu0 0.0
          %1095 = vmatpush2.msra.mxu0 0.0
          %1096 = vmatprep.mubr.f32.mxu0 0.0
          %v1097 = vand.u32 %v286, 4294901760
          %v1098 = vsub.f32 %v286, %v1097
          %v1099 = vand.u32 %v1098, 4294901760
          %1100 = vmatmul.mubr.f32.gmra.mxu0 %v1099
          %v1101 = vpop.f32.mrf.mxu0
          %v1102 = vadd.f32 %v1025, %v1101
          %v1103 = vpop.f32.mrf.mxu0
          %1104 = vdwg.mxu0
          %1105 = vmatprep.subr.mxu0 0.0
          %1106 = vmatpush1.msra.mxu0 0.0
          %1107 = vmatprep.subr.mxu0 0.0
          %1108 = vmatpush1.msra.mxu0 0.0
          %1109 = vmatprep.subr.mxu0 0.0
          %1110 = vmatpush1.msra.mxu0 0.0
          %1111 = vmatprep.subr.mxu0 0.0
          %1112 = vmatpush1.msra.mxu0 0.0
          %1113 = vmatprep.subr.mxu0 0.0
          %1114 = vmatpush1.msra.mxu0 0.0
          %1115 = vmatprep.subr.mxu0 0.0
          %1116 = vmatpush1.msra.mxu0 0.0
          %1117 = vmatprep.subr.mxu0 0.0
          %1118 = vmatpush1.msra.mxu0 0.0
          %1119 = vmatprep.subr.mxu0 0.0
          %1120 = vmatpush1.msra.mxu0 0.0
          %1121 = vmatprep.subr.mxu0 0.0
          %1122 = vmatpush1.msra.mxu0 0.0
          %1123 = vmatprep.subr.mxu0 0.0
          %1124 = vmatpush1.msra.mxu0 0.0
          %1125 = vmatprep.subr.mxu0 0.0
          %1126 = vmatpush1.msra.mxu0 0.0
          %1127 = vmatprep.subr.mxu0 0.0
          %1128 = vmatpush1.msra.mxu0 0.0
          %1129 = vmatprep.subr.mxu0 0.0
          %v1130 = vand.u32 %v282, 4294901760
          %v1131 = vsub.f32 %v282, %v1130
          %v1132 = vand.u32 %v1131, 4294901760
          %1133 = vmatpush1.msra.mxu0 %v1132
          %1134 = vmatprep.subr.mxu0 0.0
          %v1135 = vand.u32 %v280, 4294901760
          %v1136 = vsub.f32 %v280, %v1135
          %v1137 = vand.u32 %v1136, 4294901760
          %1138 = vmatpush1.msra.mxu0 %v1137
          %1139 = vmatprep.subr.mxu0 0.0
          %v1140 = vand.u32 %v278, 4294901760
          %v1141 = vsub.f32 %v278, %v1140
          %v1142 = vand.u32 %v1141, 4294901760
          %1143 = vmatpush1.msra.mxu0 %v1142
          %1144 = vmatprep.subr.mxu0 0.0
          %v1145 = vand.u32 %v276, 4294901760
          %v1146 = vsub.f32 %v276, %v1145
          %v1147 = vand.u32 %v1146, 4294901760
          %1148 = vmatpush1.msra.mxu0 %v1147
          %1149 = vmatprep.subr.mxu0 0.0
          %1150 = vmatpush2.msra.mxu0 0.0
          %1151 = vmatprep.subr.mxu0 0.0
          %1152 = vmatpush2.msra.mxu0 0.0
          %1153 = vmatprep.subr.mxu0 0.0
          %1154 = vmatpush2.msra.mxu0 0.0
          %1155 = vmatprep.subr.mxu0 0.0
          %1156 = vmatpush2.msra.mxu0 0.0
          %1157 = vmatprep.subr.mxu0 0.0
          %1158 = vmatpush2.msra.mxu0 0.0
          %1159 = vmatprep.subr.mxu0 0.0
          %1160 = vmatpush2.msra.mxu0 0.0
          %1161 = vmatprep.subr.mxu0 0.0
          %1162 = vmatpush2.msra.mxu0 0.0
          %1163 = vmatprep.subr.mxu0 0.0
          %1164 = vmatpush2.msra.mxu0 0.0
          %1165 = vmatprep.subr.mxu0 0.0
          %1166 = vmatpush2.msra.mxu0 0.0
          %1167 = vmatprep.subr.mxu0 0.0
          %1168 = vmatpush2.msra.mxu0 0.0
          %1169 = vmatprep.subr.mxu0 0.0
          %1170 = vmatpush2.msra.mxu0 0.0
          %1171 = vmatprep.subr.mxu0 0.0
          %1172 = vmatpush2.msra.mxu0 0.0
          %1173 = vmatprep.subr.mxu0 0.0
          %1174 = vmatpush2.msra.mxu0 0.0
          %1175 = vmatprep.subr.mxu0 0.0
          %1176 = vmatpush2.msra.mxu0 0.0
          %1177 = vmatprep.subr.mxu0 0.0
          %1178 = vmatpush2.msra.mxu0 0.0
          %1179 = vmatprep.subr.mxu0 0.0
          %1180 = vmatpush2.msra.mxu0 0.0
          %1181 = vmatprep.mubr.f32.mxu0 0.0
          %v1182 = vand.u32 %v286, 4294901760
          %1183 = vmatmul.mubr.f32.gmra.mxu0 %v1182
          %v1184 = vpop.f32.mrf.mxu0
          %v1185 = vadd.f32 %v1102, %v1184
          %v1186 = vpop.f32.mrf.mxu0
          %1187 = vdwg.mxu0
          %1188 = vmatprep.subr.mxu0 0.0
          %1189 = vmatpush1.msra.mxu0 0.0
          %1190 = vmatprep.subr.mxu0 0.0
          %1191 = vmatpush1.msra.mxu0 0.0
          %1192 = vmatprep.subr.mxu0 0.0
          %1193 = vmatpush1.msra.mxu0 0.0
          %1194 = vmatprep.subr.mxu0 0.0
          %1195 = vmatpush1.msra.mxu0 0.0
          %1196 = vmatprep.subr.mxu0 0.0
          %1197 = vmatpush1.msra.mxu0 0.0
          %1198 = vmatprep.subr.mxu0 0.0
          %1199 = vmatpush1.msra.mxu0 0.0
          %1200 = vmatprep.subr.mxu0 0.0
          %1201 = vmatpush1.msra.mxu0 0.0
          %1202 = vmatprep.subr.mxu0 0.0
          %1203 = vmatpush1.msra.mxu0 0.0
          %1204 = vmatprep.subr.mxu0 0.0
          %1205 = vmatpush1.msra.mxu0 0.0
          %1206 = vmatprep.subr.mxu0 0.0
          %1207 = vmatpush1.msra.mxu0 0.0
          %1208 = vmatprep.subr.mxu0 0.0
          %1209 = vmatpush1.msra.mxu0 0.0
          %1210 = vmatprep.subr.mxu0 0.0
          %1211 = vmatpush1.msra.mxu0 0.0
          %1212 = vmatprep.subr.mxu0 0.0
          %v1213 = vand.u32 %v282, 4294901760
          %1214 = vmatpush1.msra.mxu0 %v1213
          %1215 = vmatprep.subr.mxu0 0.0
          %v1216 = vand.u32 %v280, 4294901760
          %1217 = vmatpush1.msra.mxu0 %v1216
          %1218 = vmatprep.subr.mxu0 0.0
          %v1219 = vand.u32 %v278, 4294901760
          %1220 = vmatpush1.msra.mxu0 %v1219
          %1221 = vmatprep.subr.mxu0 0.0
          %v1222 = vand.u32 %v276, 4294901760
          %1223 = vmatpush1.msra.mxu0 %v1222
          %1224 = vmatprep.subr.mxu0 0.0
          %1225 = vmatpush2.msra.mxu0 0.0
          %1226 = vmatprep.subr.mxu0 0.0
          %1227 = vmatpush2.msra.mxu0 0.0
          %1228 = vmatprep.subr.mxu0 0.0
          %1229 = vmatpush2.msra.mxu0 0.0
          %1230 = vmatprep.subr.mxu0 0.0
          %1231 = vmatpush2.msra.mxu0 0.0
          %1232 = vmatprep.subr.mxu0 0.0
          %1233 = vmatpush2.msra.mxu0 0.0
          %1234 = vmatprep.subr.mxu0 0.0
          %1235 = vmatpush2.msra.mxu0 0.0
          %1236 = vmatprep.subr.mxu0 0.0
          %1237 = vmatpush2.msra.mxu0 0.0
          %1238 = vmatprep.subr.mxu0 0.0
          %1239 = vmatpush2.msra.mxu0 0.0
          %1240 = vmatprep.subr.mxu0 0.0
          %1241 = vmatpush2.msra.mxu0 0.0
          %1242 = vmatprep.subr.mxu0 0.0
          %1243 = vmatpush2.msra.mxu0 0.0
          %1244 = vmatprep.subr.mxu0 0.0
          %1245 = vmatpush2.msra.mxu0 0.0
          %1246 = vmatprep.subr.mxu0 0.0
          %1247 = vmatpush2.msra.mxu0 0.0
          %1248 = vmatprep.subr.mxu0 0.0
          %1249 = vmatpush2.msra.mxu0 0.0
          %1250 = vmatprep.subr.mxu0 0.0
          %1251 = vmatpush2.msra.mxu0 0.0
          %1252 = vmatprep.subr.mxu0 0.0
          %1253 = vmatpush2.msra.mxu0 0.0
          %1254 = vmatprep.subr.mxu0 0.0
          %1255 = vmatpush2.msra.mxu0 0.0
          %1256 = vmatprep.mubr.f32.mxu0 0.0
          %v1257 = vand.u32 %v286, 4294901760
          %1258 = vmatmul.mubr.f32.gmra.mxu0 %v1257
          %v1259 = vpop.f32.mrf.mxu0
          %v1260 = vadd.f32 %v1185, %v1259
          %v1261 = vpop.f32.mrf.mxu0
          %1262 = vdwg.mxu0
          %v1263 = vmax.f32 %v1260, 0.0
          %vm1264 = vcmask 15360
          %v1266 = vsel %vm1264, %v774, 0
          %v1269 = vsel %vm1264, %v775, 0
          %v1272 = vsel %vm1264, %v776, 0
          %v1275 = vsel %vm1264, %v777, 0
          %vm1277 = vcmask 1041408
          %v1279 = vsel %vm1277, %v1263, 0
          %1281 = vmatprep.subr.mxu0 0.0
          %1282 = vmatpush1.msra.mxu0 0.0
          %1283 = vmatprep.subr.mxu0 0.0
          %1284 = vmatpush1.msra.mxu0 0.0
          %1285 = vmatprep.subr.mxu0 0.0
          %1286 = vmatpush1.msra.mxu0 0.0
          %1287 = vmatprep.subr.mxu0 0.0
          %1288 = vmatpush1.msra.mxu0 0.0
          %1289 = vmatprep.subr.mxu0 0.0
          %1290 = vmatpush1.msra.mxu0 0.0
          %1291 = vmatprep.subr.mxu0 0.0
          %1292 = vmatpush1.msra.mxu0 0.0
          %1293 = vmatprep.subr.mxu0 0.0
          %1294 = vmatpush1.msra.mxu0 0.0
          %1295 = vmatprep.subr.mxu0 0.0
          %1296 = vmatpush1.msra.mxu0 0.0
          %1297 = vmatprep.subr.mxu0 0.0
          %1298 = vmatpush1.msra.mxu0 0.0
          %1299 = vmatprep.subr.mxu0 0.0
          %1300 = vmatpush1.msra.mxu0 0.0
          %1301 = vmatprep.subr.mxu0 0.0
          %1302 = vmatpush1.msra.mxu0 0.0
          %1303 = vmatprep.subr.mxu0 0.0
          %1304 = vmatpush1.msra.mxu0 0.0
          %1305 = vmatprep.subr.mxu0 0.0
          %1306 = vmatpush1.msra.mxu0 0.0
          %1307 = vmatprep.subr.mxu0 0.0
          %1308 = vmatpush1.msra.mxu0 0.0
          %1309 = vmatprep.subr.mxu0 0.0
          %1310 = vmatpush1.msra.mxu0 0.0
          %1311 = vmatprep.subr.mxu0 0.0
          %v1312 = vand.u32 %v1279, 4294901760
          %1313 = vmatpush1.msra.mxu0 %v1312
          %1314 = vmatprep.subr.mxu0 0.0
          %1315 = vmatpush2.msra.mxu0 0.0
          %1316 = vmatprep.subr.mxu0 0.0
          %1317 = vmatpush2.msra.mxu0 0.0
          %1318 = vmatprep.subr.mxu0 0.0
          %1319 = vmatpush2.msra.mxu0 0.0
          %1320 = vmatprep.subr.mxu0 0.0
          %1321 = vmatpush2.msra.mxu0 0.0
          %1322 = vmatprep.subr.mxu0 0.0
          %1323 = vmatpush2.msra.mxu0 0.0
          %1324 = vmatprep.subr.mxu0 0.0
          %1325 = vmatpush2.msra.mxu0 0.0
          %1326 = vmatprep.subr.mxu0 0.0
          %1327 = vmatpush2.msra.mxu0 0.0
          %1328 = vmatprep.subr.mxu0 0.0
          %1329 = vmatpush2.msra.mxu0 0.0
          %1330 = vmatprep.subr.mxu0 0.0
          %1331 = vmatpush2.msra.mxu0 0.0
          %1332 = vmatprep.subr.mxu0 0.0
          %1333 = vmatpush2.msra.mxu0 0.0
          %1334 = vmatprep.subr.mxu0 0.0
          %1335 = vmatpush2.msra.mxu0 0.0
          %1336 = vmatprep.subr.mxu0 0.0
          %1337 = vmatpush2.msra.mxu0 0.0
          %1338 = vmatprep.subr.mxu0 0.0
          %1339 = vmatpush2.msra.mxu0 0.0
          %1340 = vmatprep.subr.mxu0 0.0
          %1341 = vmatpush2.msra.mxu0 0.0
          %1342 = vmatprep.subr.mxu0 0.0
          %1343 = vmatpush2.msra.mxu0 0.0
          %1344 = vmatprep.subr.mxu0 0.0
          %1345 = vmatpush2.msra.mxu0 0.0
          %1346 = vmatprep.mubr.f32.mxu0 0.0
          %v1347 = vand.u32 %v1266, 4294901760
          %v1348 = vsub.f32 %v1266, %v1347
          %v1349 = vand.u32 %v1348, 4294901760
          %v1350 = vsub.f32 %v1348, %v1349
          %v1351 = vand.u32 %v1350, 4294901760
          %1352 = vmatmul.mubr.f32.gmra.mxu0 %v1351
          %v1353 = vpop.f32.mrf.mxu0
          %v1354 = vadd.f32 0.0, %v1353
          %v1355 = vpop.f32.mrf.mxu0
          %1356 = vmatprep.mubr.f32.mxu0 0.0
          %v1357 = vand.u32 %v1269, 4294901760
          %v1358 = vsub.f32 %v1269, %v1357
          %v1359 = vand.u32 %v1358, 4294901760
          %v1360 = vsub.f32 %v1358, %v1359
          %v1361 = vand.u32 %v1360, 4294901760
          %1362 = vmatmul.mubr.f32.gmra.mxu0 %v1361
          %v1363 = vpop.f32.mrf.mxu0
          %v1364 = vadd.f32 0.0, %v1363
          %v1365 = vpop.f32.mrf.mxu0
          %1366 = vmatprep.mubr.f32.mxu0 0.0
          %v1367 = vand.u32 %v1272, 4294901760
          %v1368 = vsub.f32 %v1272, %v1367
          %v1369 = vand.u32 %v1368, 4294901760
          %v1370 = vsub.f32 %v1368, %v1369
          %v1371 = vand.u32 %v1370, 4294901760
          %1372 = vmatmul.mubr.f32.gmra.mxu0 %v1371
          %v1373 = vpop.f32.mrf.mxu0
          %v1374 = vadd.f32 0.0, %v1373
          %v1375 = vpop.f32.mrf.mxu0
          %1376 = vmatprep.mubr.f32.mxu0 0.0
          %v1377 = vand.u32 %v1275, 4294901760
          %v1378 = vsub.f32 %v1275, %v1377
          %v1379 = vand.u32 %v1378, 4294901760
          %v1380 = vsub.f32 %v1378, %v1379
          %v1381 = vand.u32 %v1380, 4294901760
          %1382 = vmatmul.mubr.f32.gmra.mxu0 %v1381
          %v1383 = vpop.f32.mrf.mxu0
          %v1384 = vadd.f32 0.0, %v1383
          %v1385 = vpop.f32.mrf.mxu0
          %1386 = vdwg.mxu0
          %1387 = vmatprep.subr.mxu0 0.0
          %1388 = vmatpush1.msra.mxu0 0.0
          %1389 = vmatprep.subr.mxu0 0.0
          %1390 = vmatpush1.msra.mxu0 0.0
          %1391 = vmatprep.subr.mxu0 0.0
          %1392 = vmatpush1.msra.mxu0 0.0
          %1393 = vmatprep.subr.mxu0 0.0
          %1394 = vmatpush1.msra.mxu0 0.0
          %1395 = vmatprep.subr.mxu0 0.0
          %1396 = vmatpush1.msra.mxu0 0.0
          %1397 = vmatprep.subr.mxu0 0.0
          %1398 = vmatpush1.msra.mxu0 0.0
          %1399 = vmatprep.subr.mxu0 0.0
          %1400 = vmatpush1.msra.mxu0 0.0
          %1401 = vmatprep.subr.mxu0 0.0
          %1402 = vmatpush1.msra.mxu0 0.0
          %1403 = vmatprep.subr.mxu0 0.0
          %1404 = vmatpush1.msra.mxu0 0.0
          %1405 = vmatprep.subr.mxu0 0.0
          %1406 = vmatpush1.msra.mxu0 0.0
          %1407 = vmatprep.subr.mxu0 0.0
          %1408 = vmatpush1.msra.mxu0 0.0
          %1409 = vmatprep.subr.mxu0 0.0
          %1410 = vmatpush1.msra.mxu0 0.0
          %1411 = vmatprep.subr.mxu0 0.0
          %1412 = vmatpush1.msra.mxu0 0.0
          %1413 = vmatprep.subr.mxu0 0.0
          %1414 = vmatpush1.msra.mxu0 0.0
          %1415 = vmatprep.subr.mxu0 0.0
          %1416 = vmatpush1.msra.mxu0 0.0
          %1417 = vmatprep.subr.mxu0 0.0
          %v1418 = vand.u32 %v1279, 4294901760
          %v1419 = vsub.f32 %v1279, %v1418
          %v1420 = vand.u32 %v1419, 4294901760
          %v1421 = vsub.f32 %v1419, %v1420
          %v1422 = vand.u32 %v1421, 4294901760
          %1423 = vmatpush1.msra.mxu0 %v1422
          %1424 = vmatprep.subr.mxu0 0.0
          %1425 = vmatpush2.msra.mxu0 0.0
          %1426 = vmatprep.subr.mxu0 0.0
          %1427 = vmatpush2.msra.mxu0 0.0
          %1428 = vmatprep.subr.mxu0 0.0
          %1429 = vmatpush2.msra.mxu0 0.0
          %1430 = vmatprep.subr.mxu0 0.0
          %1431 = vmatpush2.msra.mxu0 0.0
          %1432 = vmatprep.subr.mxu0 0.0
          %1433 = vmatpush2.msra.mxu0 0.0
          %1434 = vmatprep.subr.mxu0 0.0
          %1435 = vmatpush2.msra.mxu0 0.0
          %1436 = vmatprep.subr.mxu0 0.0
          %1437 = vmatpush2.msra.mxu0 0.0
          %1438 = vmatprep.subr.mxu0 0.0
          %1439 = vmatpush2.msra.mxu0 0.0
          %1440 = vmatprep.subr.mxu0 0.0
          %1441 = vmatpush2.msra.mxu0 0.0
          %1442 = vmatprep.subr.mxu0 0.0
          %1443 = vmatpush2.msra.mxu0 0.0
          %1444 = vmatprep.subr.mxu0 0.0
          %1445 = vmatpush2.msra.mxu0 0.0
          %1446 = vmatprep.subr.mxu0 0.0
          %1447 = vmatpush2.msra.mxu0 0.0
          %1448 = vmatprep.subr.mxu0 0.0
          %1449 = vmatpush2.msra.mxu0 0.0
          %1450 = vmatprep.subr.mxu0 0.0
          %1451 = vmatpush2.msra.mxu0 0.0
          %1452 = vmatprep.subr.mxu0 0.0
          %1453 = vmatpush2.msra.mxu0 0.0
          %1454 = vmatprep.subr.mxu0 0.0
          %1455 = vmatpush2.msra.mxu0 0.0
          %1456 = vmatprep.mubr.f32.mxu0 0.0
          %v1457 = vand.u32 %v1266, 4294901760
          %1458 = vmatmul.mubr.f32.gmra.mxu0 %v1457
          %v1459 = vpop.f32.mrf.mxu0
          %v1460 = vadd.f32 %v1354, %v1459
          %v1461 = vpop.f32.mrf.mxu0
          %1462 = vmatprep.mubr.f32.mxu0 0.0
          %v1463 = vand.u32 %v1269, 4294901760
          %1464 = vmatmul.mubr.f32.gmra.mxu0 %v1463
          %v1465 = vpop.f32.mrf.mxu0
          %v1466 = vadd.f32 %v1364, %v1465
          %v1467 = vpop.f32.mrf.mxu0
          %1468 = vmatprep.mubr.f32.mxu0 0.0
          %v1469 = vand.u32 %v1272, 4294901760
          %1470 = vmatmul.mubr.f32.gmra.mxu0 %v1469
          %v1471 = vpop.f32.mrf.mxu0
          %v1472 = vadd.f32 %v1374, %v1471
          %v1473 = vpop.f32.mrf.mxu0
          %1474 = vmatprep.mubr.f32.mxu0 0.0
          %v1475 = vand.u32 %v1275, 4294901760
          %1476 = vmatmul.mubr.f32.gmra.mxu0 %v1475
          %v1477 = vpop.f32.mrf.mxu0
          %v1478 = vadd.f32 %v1384, %v1477
          %v1479 = vpop.f32.mrf.mxu0
          %1480 = vdwg.mxu0
          %1481 = vmatprep.subr.mxu0 0.0
          %1482 = vmatpush1.msra.mxu0 0.0
          %1483 = vmatprep.subr.mxu0 0.0
          %1484 = vmatpush1.msra.mxu0 0.0
          %1485 = vmatprep.subr.mxu0 0.0
          %1486 = vmatpush1.msra.mxu0 0.0
          %1487 = vmatprep.subr.mxu0 0.0
          %1488 = vmatpush1.msra.mxu0 0.0
          %1489 = vmatprep.subr.mxu0 0.0
          %1490 = vmatpush1.msra.mxu0 0.0
          %1491 = vmatprep.subr.mxu0 0.0
          %1492 = vmatpush1.msra.mxu0 0.0
          %1493 = vmatprep.subr.mxu0 0.0
          %1494 = vmatpush1.msra.mxu0 0.0
          %1495 = vmatprep.subr.mxu0 0.0
          %1496 = vmatpush1.msra.mxu0 0.0
          %1497 = vmatprep.subr.mxu0 0.0
          %1498 = vmatpush1.msra.mxu0 0.0
          %1499 = vmatprep.subr.mxu0 0.0
          %1500 = vmatpush1.msra.mxu0 0.0
          %1501 = vmatprep.subr.mxu0 0.0
          %1502 = vmatpush1.msra.mxu0 0.0
          %1503 = vmatprep.subr.mxu0 0.0
          %1504 = vmatpush1.msra.mxu0 0.0
          %1505 = vmatprep.subr.mxu0 0.0
          %1506 = vmatpush1.msra.mxu0 0.0
          %1507 = vmatprep.subr.mxu0 0.0
          %1508 = vmatpush1.msra.mxu0 0.0
          %1509 = vmatprep.subr.mxu0 0.0
          %1510 = vmatpush1.msra.mxu0 0.0
          %1511 = vmatprep.subr.mxu0 0.0
          %v1512 = vand.u32 %v1279, 4294901760
          %v1513 = vsub.f32 %v1279, %v1512
          %1514 = vmatpush1.msra.mxu0 %v1513
          %1515 = vmatprep.subr.mxu0 0.0
          %1516 = vmatpush2.msra.mxu0 0.0
          %1517 = vmatprep.subr.mxu0 0.0
          %1518 = vmatpush2.msra.mxu0 0.0
          %1519 = vmatprep.subr.mxu0 0.0
          %1520 = vmatpush2.msra.mxu0 0.0
          %1521 = vmatprep.subr.mxu0 0.0
          %1522 = vmatpush2.msra.mxu0 0.0
          %1523 = vmatprep.subr.mxu0 0.0
          %1524 = vmatpush2.msra.mxu0 0.0
          %1525 = vmatprep.subr.mxu0 0.0
          %1526 = vmatpush2.msra.mxu0 0.0
          %1527 = vmatprep.subr.mxu0 0.0
          %1528 = vmatpush2.msra.mxu0 0.0
          %1529 = vmatprep.subr.mxu0 0.0
          %1530 = vmatpush2.msra.mxu0 0.0
          %1531 = vmatprep.subr.mxu0 0.0
          %1532 = vmatpush2.msra.mxu0 0.0
          %1533 = vmatprep.subr.mxu0 0.0
          %1534 = vmatpush2.msra.mxu0 0.0
          %1535 = vmatprep.subr.mxu0 0.0
          %1536 = vmatpush2.msra.mxu0 0.0
          %1537 = vmatprep.subr.mxu0 0.0
          %1538 = vmatpush2.msra.mxu0 0.0
          %1539 = vmatprep.subr.mxu0 0.0
          %1540 = vmatpush2.msra.mxu0 0.0
          %1541 = vmatprep.subr.mxu0 0.0
          %1542 = vmatpush2.msra.mxu0 0.0
          %1543 = vmatprep.subr.mxu0 0.0
          %1544 = vmatpush2.msra.mxu0 0.0
          %1545 = vmatprep.subr.mxu0 0.0
          %1546 = vmatpush2.msra.mxu0 0.0
          %1547 = vmatprep.mubr.f32.mxu0 0.0
          %v1548 = vand.u32 %v1266, 4294901760
          %v1549 = vsub.f32 %v1266, %v1548
          %1550 = vmatmul.mubr.f32.gmra.mxu0 %v1549
          %v1551 = vpop.f32.mrf.mxu0
          %v1552 = vadd.f32 %v1460, %v1551
          %v1553 = vpop.f32.mrf.mxu0
          %1554 = vmatprep.mubr.f32.mxu0 0.0
          %v1555 = vand.u32 %v1269, 4294901760
          %v1556 = vsub.f32 %v1269, %v1555
          %1557 = vmatmul.mubr.f32.gmra.mxu0 %v1556
          %v1558 = vpop.f32.mrf.mxu0
          %v1559 = vadd.f32 %v1466, %v1558
          %v1560 = vpop.f32.mrf.mxu0
          %1561 = vmatprep.mubr.f32.mxu0 0.0
          %v1562 = vand.u32 %v1272, 4294901760
          %v1563 = vsub.f32 %v1272, %v1562
          %1564 = vmatmul.mubr.f32.gmra.mxu0 %v1563
          %v1565 = vpop.f32.mrf.mxu0
          %v1566 = vadd.f32 %v1472, %v1565
          %v1567 = vpop.f32.mrf.mxu0
          %1568 = vmatprep.mubr.f32.mxu0 0.0
          %v1569 = vand.u32 %v1275, 4294901760
          %v1570 = vsub.f32 %v1275, %v1569
          %1571 = vmatmul.mubr.f32.gmra.mxu0 %v1570
          %v1572 = vpop.f32.mrf.mxu0
          %v1573 = vadd.f32 %v1478, %v1572
          %v1574 = vpop.f32.mrf.mxu0
          %1575 = vdwg.mxu0
          %1576 = vmatprep.subr.mxu0 0.0
          %1577 = vmatpush1.msra.mxu0 0.0
          %1578 = vmatprep.subr.mxu0 0.0
          %1579 = vmatpush1.msra.mxu0 0.0
          %1580 = vmatprep.subr.mxu0 0.0
          %1581 = vmatpush1.msra.mxu0 0.0
          %1582 = vmatprep.subr.mxu0 0.0
          %1583 = vmatpush1.msra.mxu0 0.0
          %1584 = vmatprep.subr.mxu0 0.0
          %1585 = vmatpush1.msra.mxu0 0.0
          %1586 = vmatprep.subr.mxu0 0.0
          %1587 = vmatpush1.msra.mxu0 0.0
          %1588 = vmatprep.subr.mxu0 0.0
          %1589 = vmatpush1.msra.mxu0 0.0
          %1590 = vmatprep.subr.mxu0 0.0
          %1591 = vmatpush1.msra.mxu0 0.0
          %1592 = vmatprep.subr.mxu0 0.0
          %1593 = vmatpush1.msra.mxu0 0.0
          %1594 = vmatprep.subr.mxu0 0.0
          %1595 = vmatpush1.msra.mxu0 0.0
          %1596 = vmatprep.subr.mxu0 0.0
          %1597 = vmatpush1.msra.mxu0 0.0
          %1598 = vmatprep.subr.mxu0 0.0
          %1599 = vmatpush1.msra.mxu0 0.0
          %1600 = vmatprep.subr.mxu0 0.0
          %1601 = vmatpush1.msra.mxu0 0.0
          %1602 = vmatprep.subr.mxu0 0.0
          %1603 = vmatpush1.msra.mxu0 0.0
          %1604 = vmatprep.subr.mxu0 0.0
          %1605 = vmatpush1.msra.mxu0 0.0
          %1606 = vmatprep.subr.mxu0 0.0
          %v1607 = vand.u32 %v1279, 4294901760
          %1608 = vmatpush1.msra.mxu0 %v1607
          %1609 = vmatprep.subr.mxu0 0.0
          %1610 = vmatpush2.msra.mxu0 0.0
          %1611 = vmatprep.subr.mxu0 0.0
          %1612 = vmatpush2.msra.mxu0 0.0
          %1613 = vmatprep.subr.mxu0 0.0
          %1614 = vmatpush2.msra.mxu0 0.0
          %1615 = vmatprep.subr.mxu0 0.0
          %1616 = vmatpush2.msra.mxu0 0.0
          %1617 = vmatprep.subr.mxu0 0.0
          %1618 = vmatpush2.msra.mxu0 0.0
          %1619 = vmatprep.subr.mxu0 0.0
          %1620 = vmatpush2.msra.mxu0 0.0
          %1621 = vmatprep.subr.mxu0 0.0
          %1622 = vmatpush2.msra.mxu0 0.0
          %1623 = vmatprep.subr.mxu0 0.0
          %1624 = vmatpush2.msra.mxu0 0.0
          %1625 = vmatprep.subr.mxu0 0.0
          %1626 = vmatpush2.msra.mxu0 0.0
          %1627 = vmatprep.subr.mxu0 0.0
          %1628 = vmatpush2.msra.mxu0 0.0
          %1629 = vmatprep.subr.mxu0 0.0
          %1630 = vmatpush2.msra.mxu0 0.0
          %1631 = vmatprep.subr.mxu0 0.0
          %1632 = vmatpush2.msra.mxu0 0.0
          %1633 = vmatprep.subr.mxu0 0.0
          %1634 = vmatpush2.msra.mxu0 0.0
          %1635 = vmatprep.subr.mxu0 0.0
          %1636 = vmatpush2.msra.mxu0 0.0
          %1637 = vmatprep.subr.mxu0 0.0
          %1638 = vmatpush2.msra.mxu0 0.0
          %1639 = vmatprep.subr.mxu0 0.0
          %1640 = vmatpush2.msra.mxu0 0.0
          %1641 = vmatprep.mubr.f32.mxu0 0.0
          %v1642 = vand.u32 %v1266, 4294901760
          %v1643 = vsub.f32 %v1266, %v1642
          %v1644 = vand.u32 %v1643, 4294901760
          %1645 = vmatmul.mubr.f32.gmra.mxu0 %v1644
          %v1646 = vpop.f32.mrf.mxu0
          %v1647 = vadd.f32 %v1552, %v1646
          %v1648 = vpop.f32.mrf.mxu0
          %1649 = vmatprep.mubr.f32.mxu0 0.0
          %v1650 = vand.u32 %v1269, 4294901760
          %v1651 = vsub.f32 %v1269, %v1650
          %v1652 = vand.u32 %v1651, 4294901760
          %1653 = vmatmul.mubr.f32.gmra.mxu0 %v1652
          %v1654 = vpop.f32.mrf.mxu0
          %v1655 = vadd.f32 %v1559, %v1654
          %v1656 = vpop.f32.mrf.mxu0
          %1657 = vmatprep.mubr.f32.mxu0 0.0
          %v1658 = vand.u32 %v1272, 4294901760
          %v1659 = vsub.f32 %v1272, %v1658
          %v1660 = vand.u32 %v1659, 4294901760
          %1661 = vmatmul.mubr.f32.gmra.mxu0 %v1660
          %v1662 = vpop.f32.mrf.mxu0
          %v1663 = vadd.f32 %v1566, %v1662
          %v1664 = vpop.f32.mrf.mxu0
          %1665 = vmatprep.mubr.f32.mxu0 0.0
          %v1666 = vand.u32 %v1275, 4294901760
          %v1667 = vsub.f32 %v1275, %v1666
          %v1668 = vand.u32 %v1667, 4294901760
          %1669 = vmatmul.mubr.f32.gmra.mxu0 %v1668
          %v1670 = vpop.f32.mrf.mxu0
          %v1671 = vadd.f32 %v1573, %v1670
          %v1672 = vpop.f32.mrf.mxu0
          %1673 = vdwg.mxu0
          %1674 = vmatprep.subr.mxu0 0.0
          %1675 = vmatpush1.msra.mxu0 0.0
          %1676 = vmatprep.subr.mxu0 0.0
          %1677 = vmatpush1.msra.mxu0 0.0
          %1678 = vmatprep.subr.mxu0 0.0
          %1679 = vmatpush1.msra.mxu0 0.0
          %1680 = vmatprep.subr.mxu0 0.0
          %1681 = vmatpush1.msra.mxu0 0.0
          %1682 = vmatprep.subr.mxu0 0.0
          %1683 = vmatpush1.msra.mxu0 0.0
          %1684 = vmatprep.subr.mxu0 0.0
          %1685 = vmatpush1.msra.mxu0 0.0
          %1686 = vmatprep.subr.mxu0 0.0
          %1687 = vmatpush1.msra.mxu0 0.0
          %1688 = vmatprep.subr.mxu0 0.0
          %1689 = vmatpush1.msra.mxu0 0.0
          %1690 = vmatprep.subr.mxu0 0.0
          %1691 = vmatpush1.msra.mxu0 0.0
          %1692 = vmatprep.subr.mxu0 0.0
          %1693 = vmatpush1.msra.mxu0 0.0
          %1694 = vmatprep.subr.mxu0 0.0
          %1695 = vmatpush1.msra.mxu0 0.0
          %1696 = vmatprep.subr.mxu0 0.0
          %1697 = vmatpush1.msra.mxu0 0.0
          %1698 = vmatprep.subr.mxu0 0.0
          %1699 = vmatpush1.msra.mxu0 0.0
          %1700 = vmatprep.subr.mxu0 0.0
          %1701 = vmatpush1.msra.mxu0 0.0
          %1702 = vmatprep.subr.mxu0 0.0
          %1703 = vmatpush1.msra.mxu0 0.0
          %1704 = vmatprep.subr.mxu0 0.0
          %v1705 = vand.u32 %v1279, 4294901760
          %v1706 = vsub.f32 %v1279, %v1705
          %v1707 = vand.u32 %v1706, 4294901760
          %1708 = vmatpush1.msra.mxu0 %v1707
          %1709 = vmatprep.subr.mxu0 0.0
          %1710 = vmatpush2.msra.mxu0 0.0
          %1711 = vmatprep.subr.mxu0 0.0
          %1712 = vmatpush2.msra.mxu0 0.0
          %1713 = vmatprep.subr.mxu0 0.0
          %1714 = vmatpush2.msra.mxu0 0.0
          %1715 = vmatprep.subr.mxu0 0.0
          %1716 = vmatpush2.msra.mxu0 0.0
          %1717 = vmatprep.subr.mxu0 0.0
          %1718 = vmatpush2.msra.mxu0 0.0
          %1719 = vmatprep.subr.mxu0 0.0
          %1720 = vmatpush2.msra.mxu0 0.0
          %1721 = vmatprep.subr.mxu0 0.0
          %1722 = vmatpush2.msra.mxu0 0.0
          %1723 = vmatprep.subr.mxu0 0.0
          %1724 = vmatpush2.msra.mxu0 0.0
          %1725 = vmatprep.subr.mxu0 0.0
          %1726 = vmatpush2.msra.mxu0 0.0
          %1727 = vmatprep.subr.mxu0 0.0
          %1728 = vmatpush2.msra.mxu0 0.0
          %1729 = vmatprep.subr.mxu0 0.0
          %1730 = vmatpush2.msra.mxu0 0.0
          %1731 = vmatprep.subr.mxu0 0.0
          %1732 = vmatpush2.msra.mxu0 0.0
          %1733 = vmatprep.subr.mxu0 0.0
          %1734 = vmatpush2.msra.mxu0 0.0
          %1735 = vmatprep.subr.mxu0 0.0
          %1736 = vmatpush2.msra.mxu0 0.0
          %1737 = vmatprep.subr.mxu0 0.0
          %1738 = vmatpush2.msra.mxu0 0.0
          %1739 = vmatprep.subr.mxu0 0.0
          %1740 = vmatpush2.msra.mxu0 0.0
          %1741 = vmatprep.mubr.f32.mxu0 0.0
          %v1742 = vand.u32 %v1266, 4294901760
          %1743 = vmatmul.mubr.f32.gmra.mxu0 %v1742
          %v1744 = vpop.f32.mrf.mxu0
          %v1745 = vadd.f32 %v1647, %v1744
          %v1746 = vpop.f32.mrf.mxu0
          %1747 = vmatprep.mubr.f32.mxu0 0.0
          %v1748 = vand.u32 %v1269, 4294901760
          %1749 = vmatmul.mubr.f32.gmra.mxu0 %v1748
          %v1750 = vpop.f32.mrf.mxu0
          %v1751 = vadd.f32 %v1655, %v1750
          %v1752 = vpop.f32.mrf.mxu0
          %1753 = vmatprep.mubr.f32.mxu0 0.0
          %v1754 = vand.u32 %v1272, 4294901760
          %1755 = vmatmul.mubr.f32.gmra.mxu0 %v1754
          %v1756 = vpop.f32.mrf.mxu0
          %v1757 = vadd.f32 %v1663, %v1756
          %v1758 = vpop.f32.mrf.mxu0
          %1759 = vmatprep.mubr.f32.mxu0 0.0
          %v1760 = vand.u32 %v1275, 4294901760
          %1761 = vmatmul.mubr.f32.gmra.mxu0 %v1760
          %v1762 = vpop.f32.mrf.mxu0
          %v1763 = vadd.f32 %v1671, %v1762
          %v1764 = vpop.f32.mrf.mxu0
          %1765 = vdwg.mxu0
          %1766 = vmatprep.subr.mxu0 0.0
          %1767 = vmatpush1.msra.mxu0 0.0
          %1768 = vmatprep.subr.mxu0 0.0
          %1769 = vmatpush1.msra.mxu0 0.0
          %1770 = vmatprep.subr.mxu0 0.0
          %1771 = vmatpush1.msra.mxu0 0.0
          %1772 = vmatprep.subr.mxu0 0.0
          %1773 = vmatpush1.msra.mxu0 0.0
          %1774 = vmatprep.subr.mxu0 0.0
          %1775 = vmatpush1.msra.mxu0 0.0
          %1776 = vmatprep.subr.mxu0 0.0
          %1777 = vmatpush1.msra.mxu0 0.0
          %1778 = vmatprep.subr.mxu0 0.0
          %1779 = vmatpush1.msra.mxu0 0.0
          %1780 = vmatprep.subr.mxu0 0.0
          %1781 = vmatpush1.msra.mxu0 0.0
          %1782 = vmatprep.subr.mxu0 0.0
          %1783 = vmatpush1.msra.mxu0 0.0
          %1784 = vmatprep.subr.mxu0 0.0
          %1785 = vmatpush1.msra.mxu0 0.0
          %1786 = vmatprep.subr.mxu0 0.0
          %1787 = vmatpush1.msra.mxu0 0.0
          %1788 = vmatprep.subr.mxu0 0.0
          %1789 = vmatpush1.msra.mxu0 0.0
          %1790 = vmatprep.subr.mxu0 0.0
          %1791 = vmatpush1.msra.mxu0 0.0
          %1792 = vmatprep.subr.mxu0 0.0
          %1793 = vmatpush1.msra.mxu0 0.0
          %1794 = vmatprep.subr.mxu0 0.0
          %1795 = vmatpush1.msra.mxu0 0.0
          %1796 = vmatprep.subr.mxu0 0.0
          %v1797 = vand.u32 %v1279, 4294901760
          %1798 = vmatpush1.msra.mxu0 %v1797
          %1799 = vmatprep.subr.mxu0 0.0
          %1800 = vmatpush2.msra.mxu0 0.0
          %1801 = vmatprep.subr.mxu0 0.0
          %1802 = vmatpush2.msra.mxu0 0.0
          %1803 = vmatprep.subr.mxu0 0.0
          %1804 = vmatpush2.msra.mxu0 0.0
          %1805 = vmatprep.subr.mxu0 0.0
          %1806 = vmatpush2.msra.mxu0 0.0
          %1807 = vmatprep.subr.mxu0 0.0
          %1808 = vmatpush2.msra.mxu0 0.0
          %1809 = vmatprep.subr.mxu0 0.0
          %1810 = vmatpush2.msra.mxu0 0.0
          %1811 = vmatprep.subr.mxu0 0.0
          %1812 = vmatpush2.msra.mxu0 0.0
          %1813 = vmatprep.subr.mxu0 0.0
          %1814 = vmatpush2.msra.mxu0 0.0
          %1815 = vmatprep.subr.mxu0 0.0
          %1816 = vmatpush2.msra.mxu0 0.0
          %1817 = vmatprep.subr.mxu0 0.0
          %1818 = vmatpush2.msra.mxu0 0.0
          %1819 = vmatprep.subr.mxu0 0.0
          %1820 = vmatpush2.msra.mxu0 0.0
          %1821 = vmatprep.subr.mxu0 0.0
          %1822 = vmatpush2.msra.mxu0 0.0
          %1823 = vmatprep.subr.mxu0 0.0
          %1824 = vmatpush2.msra.mxu0 0.0
          %1825 = vmatprep.subr.mxu0 0.0
          %1826 = vmatpush2.msra.mxu0 0.0
          %1827 = vmatprep.subr.mxu0 0.0
          %1828 = vmatpush2.msra.mxu0 0.0
          %1829 = vmatprep.subr.mxu0 0.0
          %1830 = vmatpush2.msra.mxu0 0.0
          %1831 = vmatprep.mubr.f32.mxu0 0.0
          %v1832 = vand.u32 %v1266, 4294901760
          %1833 = vmatmul.mubr.f32.gmra.mxu0 %v1832
          %v1834 = vpop.f32.mrf.mxu0
          %v1835 = vadd.f32 %v1745, %v1834
          %v1836 = vpop.f32.mrf.mxu0
          %1837 = vmatprep.mubr.f32.mxu0 0.0
          %v1838 = vand.u32 %v1269, 4294901760
          %1839 = vmatmul.mubr.f32.gmra.mxu0 %v1838
          %v1840 = vpop.f32.mrf.mxu0
          %v1841 = vadd.f32 %v1751, %v1840
          %v1842 = vpop.f32.mrf.mxu0
          %1843 = vmatprep.mubr.f32.mxu0 0.0
          %v1844 = vand.u32 %v1272, 4294901760
          %1845 = vmatmul.mubr.f32.gmra.mxu0 %v1844
          %v1846 = vpop.f32.mrf.mxu0
          %v1847 = vadd.f32 %v1757, %v1846
          %v1848 = vpop.f32.mrf.mxu0
          %1849 = vmatprep.mubr.f32.mxu0 0.0
          %v1850 = vand.u32 %v1275, 4294901760
          %1851 = vmatmul.mubr.f32.gmra.mxu0 %v1850
          %v1852 = vpop.f32.mrf.mxu0
          %v1853 = vadd.f32 %v1763, %v1852
          %v1854 = vpop.f32.mrf.mxu0
          %1855 = vdwg.mxu0
          %v1857 = vsel %vm1277, %v773, 0
          %1859 = vmatprep.subr.mxu0 0.0
          %1860 = vmatpush1.msra.mxu0 0.0
          %1861 = vmatprep.subr.mxu0 0.0
          %1862 = vmatpush1.msra.mxu0 0.0
          %1863 = vmatprep.subr.mxu0 0.0
          %1864 = vmatpush1.msra.mxu0 0.0
          %1865 = vmatprep.subr.mxu0 0.0
          %1866 = vmatpush1.msra.mxu0 0.0
          %1867 = vmatprep.subr.mxu0 0.0
          %1868 = vmatpush1.msra.mxu0 0.0
          %1869 = vmatprep.subr.mxu0 0.0
          %1870 = vmatpush1.msra.mxu0 0.0
          %1871 = vmatprep.subr.mxu0 0.0
          %1872 = vmatpush1.msra.mxu0 0.0
          %1873 = vmatprep.subr.mxu0 0.0
          %1874 = vmatpush1.msra.mxu0 0.0
          %1875 = vmatprep.subr.mxu0 0.0
          %1876 = vmatpush1.msra.mxu0 0.0
          %1877 = vmatprep.subr.mxu0 0.0
          %1878 = vmatpush1.msra.mxu0 0.0
          %1879 = vmatprep.subr.mxu0 0.0
          %1880 = vmatpush1.msra.mxu0 0.0
          %1881 = vmatprep.subr.mxu0 0.0
          %1882 = vmatpush1.msra.mxu0 0.0
          %1883 = vmatprep.subr.mxu0 0.0
          %1884 = vmatpush1.msra.mxu0 0.0
          %1885 = vmatprep.subr.mxu0 0.0
          %1886 = vmatpush1.msra.mxu0 0.0
          %1887 = vmatprep.subr.mxu0 0.0
          %1888 = vmatpush1.msra.mxu0 0.0
          %1889 = vmatprep.subr.mxu0 0.0
          %v1890 = vand.u32 %v1857, 4294901760
          %1891 = vmatpush1.msra.mxu0 %v1890
          %1892 = vmatprep.subr.mxu0 0.0
          %1893 = vmatpush2.msra.mxu0 0.0
          %1894 = vmatprep.subr.mxu0 0.0
          %1895 = vmatpush2.msra.mxu0 0.0
          %1896 = vmatprep.subr.mxu0 0.0
          %1897 = vmatpush2.msra.mxu0 0.0
          %1898 = vmatprep.subr.mxu0 0.0
          %1899 = vmatpush2.msra.mxu0 0.0
          %1900 = vmatprep.subr.mxu0 0.0
          %1901 = vmatpush2.msra.mxu0 0.0
          %1902 = vmatprep.subr.mxu0 0.0
          %1903 = vmatpush2.msra.mxu0 0.0
          %1904 = vmatprep.subr.mxu0 0.0
          %1905 = vmatpush2.msra.mxu0 0.0
          %1906 = vmatprep.subr.mxu0 0.0
          %1907 = vmatpush2.msra.mxu0 0.0
          %1908 = vmatprep.subr.mxu0 0.0
          %1909 = vmatpush2.msra.mxu0 0.0
          %1910 = vmatprep.subr.mxu0 0.0
          %1911 = vmatpush2.msra.mxu0 0.0
          %1912 = vmatprep.subr.mxu0 0.0
          %1913 = vmatpush2.msra.mxu0 0.0
          %1914 = vmatprep.subr.mxu0 0.0
          %1915 = vmatpush2.msra.mxu0 0.0
          %1916 = vmatprep.subr.mxu0 0.0
          %1917 = vmatpush2.msra.mxu0 0.0
          %1918 = vmatprep.subr.mxu0 0.0
          %1919 = vmatpush2.msra.mxu0 0.0
          %1920 = vmatprep.subr.mxu0 0.0
          %1921 = vmatpush2.msra.mxu0 0.0
          %1922 = vmatprep.subr.mxu0 0.0
          %1923 = vmatpush2.msra.mxu0 0.0
          %1924 = vmatprep.mubr.f32.mxu0 0.0
          %v1925 = vand.u32 %v1266, 4294901760
          %v1926 = vsub.f32 %v1266, %v1925
          %v1927 = vand.u32 %v1926, 4294901760
          %v1928 = vsub.f32 %v1926, %v1927
          %v1929 = vand.u32 %v1928, 4294901760
          %1930 = vmatmul.mubr.f32.gmra.mxu0 %v1929
          %v1931 = vpop.f32.mrf.mxu0
          %v1932 = vadd.f32 %v1835, %v1931
          %v1933 = vpop.f32.mrf.mxu0
          %1934 = vmatprep.mubr.f32.mxu0 0.0
          %v1935 = vand.u32 %v1269, 4294901760
          %v1936 = vsub.f32 %v1269, %v1935
          %v1937 = vand.u32 %v1936, 4294901760
          %v1938 = vsub.f32 %v1936, %v1937
          %v1939 = vand.u32 %v1938, 4294901760
          %1940 = vmatmul.mubr.f32.gmra.mxu0 %v1939
          %v1941 = vpop.f32.mrf.mxu0
          %v1942 = vadd.f32 %v1841, %v1941
          %v1943 = vpop.f32.mrf.mxu0
          %1944 = vmatprep.mubr.f32.mxu0 0.0
          %v1945 = vand.u32 %v1272, 4294901760
          %v1946 = vsub.f32 %v1272, %v1945
          %v1947 = vand.u32 %v1946, 4294901760
          %v1948 = vsub.f32 %v1946, %v1947
          %v1949 = vand.u32 %v1948, 4294901760
          %1950 = vmatmul.mubr.f32.gmra.mxu0 %v1949
          %v1951 = vpop.f32.mrf.mxu0
          %v1952 = vadd.f32 %v1847, %v1951
          %v1953 = vpop.f32.mrf.mxu0
          %1954 = vmatprep.mubr.f32.mxu0 0.0
          %v1955 = vand.u32 %v1275, 4294901760
          %v1956 = vsub.f32 %v1275, %v1955
          %v1957 = vand.u32 %v1956, 4294901760
          %v1958 = vsub.f32 %v1956, %v1957
          %v1959 = vand.u32 %v1958, 4294901760
          %1960 = vmatmul.mubr.f32.gmra.mxu0 %v1959
          %v1961 = vpop.f32.mrf.mxu0
          %v1962 = vadd.f32 %v1853, %v1961
          %v1963 = vpop.f32.mrf.mxu0
          %1964 = vdwg.mxu0
          %1965 = vmatprep.subr.mxu0 0.0
          %1966 = vmatpush1.msra.mxu0 0.0
          %1967 = vmatprep.subr.mxu0 0.0
          %1968 = vmatpush1.msra.mxu0 0.0
          %1969 = vmatprep.subr.mxu0 0.0
          %1970 = vmatpush1.msra.mxu0 0.0
          %1971 = vmatprep.subr.mxu0 0.0
          %1972 = vmatpush1.msra.mxu0 0.0
          %1973 = vmatprep.subr.mxu0 0.0
          %1974 = vmatpush1.msra.mxu0 0.0
          %1975 = vmatprep.subr.mxu0 0.0
          %1976 = vmatpush1.msra.mxu0 0.0
          %1977 = vmatprep.subr.mxu0 0.0
          %1978 = vmatpush1.msra.mxu0 0.0
          %1979 = vmatprep.subr.mxu0 0.0
          %1980 = vmatpush1.msra.mxu0 0.0
          %1981 = vmatprep.subr.mxu0 0.0
          %1982 = vmatpush1.msra.mxu0 0.0
          %1983 = vmatprep.subr.mxu0 0.0
          %1984 = vmatpush1.msra.mxu0 0.0
          %1985 = vmatprep.subr.mxu0 0.0
          %1986 = vmatpush1.msra.mxu0 0.0
          %1987 = vmatprep.subr.mxu0 0.0
          %1988 = vmatpush1.msra.mxu0 0.0
          %1989 = vmatprep.subr.mxu0 0.0
          %1990 = vmatpush1.msra.mxu0 0.0
          %1991 = vmatprep.subr.mxu0 0.0
          %1992 = vmatpush1.msra.mxu0 0.0
          %1993 = vmatprep.subr.mxu0 0.0
          %1994 = vmatpush1.msra.mxu0 0.0
          %1995 = vmatprep.subr.mxu0 0.0
          %v1996 = vand.u32 %v1857, 4294901760
          %v1997 = vsub.f32 %v1857, %v1996
          %v1998 = vand.u32 %v1997, 4294901760
          %v1999 = vsub.f32 %v1997, %v1998
          %v2000 = vand.u32 %v1999, 4294901760
          %2001 = vmatpush1.msra.mxu0 %v2000
          %2002 = vmatprep.subr.mxu0 0.0
          %2003 = vmatpush2.msra.mxu0 0.0
          %2004 = vmatprep.subr.mxu0 0.0
          %2005 = vmatpush2.msra.mxu0 0.0
          %2006 = vmatprep.subr.mxu0 0.0
          %2007 = vmatpush2.msra.mxu0 0.0
          %2008 = vmatprep.subr.mxu0 0.0
          %2009 = vmatpush2.msra.mxu0 0.0
          %2010 = vmatprep.subr.mxu0 0.0
          %2011 = vmatpush2.msra.mxu0 0.0
          %2012 = vmatprep.subr.mxu0 0.0
          %2013 = vmatpush2.msra.mxu0 0.0
          %2014 = vmatprep.subr.mxu0 0.0
          %2015 = vmatpush2.msra.mxu0 0.0
          %2016 = vmatprep.subr.mxu0 0.0
          %2017 = vmatpush2.msra.mxu0 0.0
          %2018 = vmatprep.subr.mxu0 0.0
          %2019 = vmatpush2.msra.mxu0 0.0
          %2020 = vmatprep.subr.mxu0 0.0
          %2021 = vmatpush2.msra.mxu0 0.0
          %2022 = vmatprep.subr.mxu0 0.0
          %2023 = vmatpush2.msra.mxu0 0.0
          %2024 = vmatprep.subr.mxu0 0.0
          %2025 = vmatpush2.msra.mxu0 0.0
          %2026 = vmatprep.subr.mxu0 0.0
          %2027 = vmatpush2.msra.mxu0 0.0
          %2028 = vmatprep.subr.mxu0 0.0
          %2029 = vmatpush2.msra.mxu0 0.0
          %2030 = vmatprep.subr.mxu0 0.0
          %2031 = vmatpush2.msra.mxu0 0.0
          %2032 = vmatprep.subr.mxu0 0.0
          %2033 = vmatpush2.msra.mxu0 0.0
          %2034 = vmatprep.mubr.f32.mxu0 0.0
          %v2035 = vand.u32 %v1266, 4294901760
          %2036 = vmatmul.mubr.f32.gmra.mxu0 %v2035
          %v2037 = vpop.f32.mrf.mxu0
          %v2038 = vadd.f32 %v1932, %v2037
          %v2039 = vpop.f32.mrf.mxu0
          %2040 = vmatprep.mubr.f32.mxu0 0.0
          %v2041 = vand.u32 %v1269, 4294901760
          %2042 = vmatmul.mubr.f32.gmra.mxu0 %v2041
          %v2043 = vpop.f32.mrf.mxu0
          %v2044 = vadd.f32 %v1942, %v2043
          %v2045 = vpop.f32.mrf.mxu0
          %2046 = vmatprep.mubr.f32.mxu0 0.0
          %v2047 = vand.u32 %v1272, 4294901760
          %2048 = vmatmul.mubr.f32.gmra.mxu0 %v2047
          %v2049 = vpop.f32.mrf.mxu0
          %v2050 = vadd.f32 %v1952, %v2049
          %v2051 = vpop.f32.mrf.mxu0
          %2052 = vmatprep.mubr.f32.mxu0 0.0
          %v2053 = vand.u32 %v1275, 4294901760
          %2054 = vmatmul.mubr.f32.gmra.mxu0 %v2053
          %v2055 = vpop.f32.mrf.mxu0
          %v2056 = vadd.f32 %v1962, %v2055
          %v2057 = vpop.f32.mrf.mxu0
          %2058 = vdwg.mxu0
          %2059 = vmatprep.subr.mxu0 0.0
          %2060 = vmatpush1.msra.mxu0 0.0
          %2061 = vmatprep.subr.mxu0 0.0
          %2062 = vmatpush1.msra.mxu0 0.0
          %2063 = vmatprep.subr.mxu0 0.0
          %2064 = vmatpush1.msra.mxu0 0.0
          %2065 = vmatprep.subr.mxu0 0.0
          %2066 = vmatpush1.msra.mxu0 0.0
          %2067 = vmatprep.subr.mxu0 0.0
          %2068 = vmatpush1.msra.mxu0 0.0
          %2069 = vmatprep.subr.mxu0 0.0
          %2070 = vmatpush1.msra.mxu0 0.0
          %2071 = vmatprep.subr.mxu0 0.0
          %2072 = vmatpush1.msra.mxu0 0.0
          %2073 = vmatprep.subr.mxu0 0.0
          %2074 = vmatpush1.msra.mxu0 0.0
          %2075 = vmatprep.subr.mxu0 0.0
          %2076 = vmatpush1.msra.mxu0 0.0
          %2077 = vmatprep.subr.mxu0 0.0
          %2078 = vmatpush1.msra.mxu0 0.0
          %2079 = vmatprep.subr.mxu0 0.0
          %2080 = vmatpush1.msra.mxu0 0.0
          %2081 = vmatprep.subr.mxu0 0.0
          %2082 = vmatpush1.msra.mxu0 0.0
          %2083 = vmatprep.subr.mxu0 0.0
          %2084 = vmatpush1.msra.mxu0 0.0
          %2085 = vmatprep.subr.mxu0 0.0
          %2086 = vmatpush1.msra.mxu0 0.0
          %2087 = vmatprep.subr.mxu0 0.0
          %2088 = vmatpush1.msra.mxu0 0.0
          %2089 = vmatprep.subr.mxu0 0.0
          %v2090 = vand.u32 %v1857, 4294901760
          %v2091 = vsub.f32 %v1857, %v2090
          %2092 = vmatpush1.msra.mxu0 %v2091
          %2093 = vmatprep.subr.mxu0 0.0
          %2094 = vmatpush2.msra.mxu0 0.0
          %2095 = vmatprep.subr.mxu0 0.0
          %2096 = vmatpush2.msra.mxu0 0.0
          %2097 = vmatprep.subr.mxu0 0.0
          %2098 = vmatpush2.msra.mxu0 0.0
          %2099 = vmatprep.subr.mxu0 0.0
          %2100 = vmatpush2.msra.mxu0 0.0
          %2101 = vmatprep.subr.mxu0 0.0
          %2102 = vmatpush2.msra.mxu0 0.0
          %2103 = vmatprep.subr.mxu0 0.0
          %2104 = vmatpush2.msra.mxu0 0.0
          %2105 = vmatprep.subr.mxu0 0.0
          %2106 = vmatpush2.msra.mxu0 0.0
          %2107 = vmatprep.subr.mxu0 0.0
          %2108 = vmatpush2.msra.mxu0 0.0
          %2109 = vmatprep.subr.mxu0 0.0
          %2110 = vmatpush2.msra.mxu0 0.0
          %2111 = vmatprep.subr.mxu0 0.0
          %2112 = vmatpush2.msra.mxu0 0.0
          %2113 = vmatprep.subr.mxu0 0.0
          %2114 = vmatpush2.msra.mxu0 0.0
          %2115 = vmatprep.subr.mxu0 0.0
          %2116 = vmatpush2.msra.mxu0 0.0
          %2117 = vmatprep.subr.mxu0 0.0
          %2118 = vmatpush2.msra.mxu0 0.0
          %2119 = vmatprep.subr.mxu0 0.0
          %2120 = vmatpush2.msra.mxu0 0.0
          %2121 = vmatprep.subr.mxu0 0.0
          %2122 = vmatpush2.msra.mxu0 0.0
          %2123 = vmatprep.subr.mxu0 0.0
          %2124 = vmatpush2.msra.mxu0 0.0
          %2125 = vmatprep.mubr.f32.mxu0 0.0
          %v2126 = vand.u32 %v1266, 4294901760
          %v2127 = vsub.f32 %v1266, %v2126
          %2128 = vmatmul.mubr.f32.gmra.mxu0 %v2127
          %v2129 = vpop.f32.mrf.mxu0
          %v2130 = vadd.f32 %v2038, %v2129
          %v2131 = vpop.f32.mrf.mxu0
          %2132 = vmatprep.mubr.f32.mxu0 0.0
          %v2133 = vand.u32 %v1269, 4294901760
          %v2134 = vsub.f32 %v1269, %v2133
          %2135 = vmatmul.mubr.f32.gmra.mxu0 %v2134
          %v2136 = vpop.f32.mrf.mxu0
          %v2137 = vadd.f32 %v2044, %v2136
          %v2138 = vpop.f32.mrf.mxu0
          %2139 = vmatprep.mubr.f32.mxu0 0.0
          %v2140 = vand.u32 %v1272, 4294901760
          %v2141 = vsub.f32 %v1272, %v2140
          %2142 = vmatmul.mubr.f32.gmra.mxu0 %v2141
          %v2143 = vpop.f32.mrf.mxu0
          %v2144 = vadd.f32 %v2050, %v2143
          %v2145 = vpop.f32.mrf.mxu0
          %2146 = vmatprep.mubr.f32.mxu0 0.0
          %v2147 = vand.u32 %v1275, 4294901760
          %v2148 = vsub.f32 %v1275, %v2147
          %2149 = vmatmul.mubr.f32.gmra.mxu0 %v2148
          %v2150 = vpop.f32.mrf.mxu0
          %v2151 = vadd.f32 %v2056, %v2150
          %v2152 = vpop.f32.mrf.mxu0
          %2153 = vdwg.mxu0
          %2154 = vmatprep.subr.mxu0 0.0
          %2155 = vmatpush1.msra.mxu0 0.0
          %2156 = vmatprep.subr.mxu0 0.0
          %2157 = vmatpush1.msra.mxu0 0.0
          %2158 = vmatprep.subr.mxu0 0.0
          %2159 = vmatpush1.msra.mxu0 0.0
          %2160 = vmatprep.subr.mxu0 0.0
          %2161 = vmatpush1.msra.mxu0 0.0
          %2162 = vmatprep.subr.mxu0 0.0
          %2163 = vmatpush1.msra.mxu0 0.0
          %2164 = vmatprep.subr.mxu0 0.0
          %2165 = vmatpush1.msra.mxu0 0.0
          %2166 = vmatprep.subr.mxu0 0.0
          %2167 = vmatpush1.msra.mxu0 0.0
          %2168 = vmatprep.subr.mxu0 0.0
          %2169 = vmatpush1.msra.mxu0 0.0
          %2170 = vmatprep.subr.mxu0 0.0
          %2171 = vmatpush1.msra.mxu0 0.0
          %2172 = vmatprep.subr.mxu0 0.0
          %2173 = vmatpush1.msra.mxu0 0.0
          %2174 = vmatprep.subr.mxu0 0.0
          %2175 = vmatpush1.msra.mxu0 0.0
          %2176 = vmatprep.subr.mxu0 0.0
          %2177 = vmatpush1.msra.mxu0 0.0
          %2178 = vmatprep.subr.mxu0 0.0
          %2179 = vmatpush1.msra.mxu0 0.0
          %2180 = vmatprep.subr.mxu0 0.0
          %2181 = vmatpush1.msra.mxu0 0.0
          %2182 = vmatprep.subr.mxu0 0.0
          %2183 = vmatpush1.msra.mxu0 0.0
          %2184 = vmatprep.subr.mxu0 0.0
          %v2185 = vand.u32 %v1857, 4294901760
          %2186 = vmatpush1.msra.mxu0 %v2185
          %2187 = vmatprep.subr.mxu0 0.0
          %2188 = vmatpush2.msra.mxu0 0.0
          %2189 = vmatprep.subr.mxu0 0.0
          %2190 = vmatpush2.msra.mxu0 0.0
          %2191 = vmatprep.subr.mxu0 0.0
          %2192 = vmatpush2.msra.mxu0 0.0
          %2193 = vmatprep.subr.mxu0 0.0
          %2194 = vmatpush2.msra.mxu0 0.0
          %2195 = vmatprep.subr.mxu0 0.0
          %2196 = vmatpush2.msra.mxu0 0.0
          %2197 = vmatprep.subr.mxu0 0.0
          %2198 = vmatpush2.msra.mxu0 0.0
          %2199 = vmatprep.subr.mxu0 0.0
          %2200 = vmatpush2.msra.mxu0 0.0
          %2201 = vmatprep.subr.mxu0 0.0
          %2202 = vmatpush2.msra.mxu0 0.0
          %2203 = vmatprep.subr.mxu0 0.0
          %2204 = vmatpush2.msra.mxu0 0.0
          %2205 = vmatprep.subr.mxu0 0.0
          %2206 = vmatpush2.msra.mxu0 0.0
          %2207 = vmatprep.subr.mxu0 0.0
          %2208 = vmatpush2.msra.mxu0 0.0
          %2209 = vmatprep.subr.mxu0 0.0
          %2210 = vmatpush2.msra.mxu0 0.0
          %2211 = vmatprep.subr.mxu0 0.0
          %2212 = vmatpush2.msra.mxu0 0.0
          %2213 = vmatprep.subr.mxu0 0.0
          %2214 = vmatpush2.msra.mxu0 0.0
          %2215 = vmatprep.subr.mxu0 0.0
          %2216 = vmatpush2.msra.mxu0 0.0
          %2217 = vmatprep.subr.mxu0 0.0
          %2218 = vmatpush2.msra.mxu0 0.0
          %2219 = vmatprep.mubr.f32.mxu0 0.0
          %v2220 = vand.u32 %v1266, 4294901760
          %v2221 = vsub.f32 %v1266, %v2220
          %v2222 = vand.u32 %v2221, 4294901760
          %2223 = vmatmul.mubr.f32.gmra.mxu0 %v2222
          %v2224 = vpop.f32.mrf.mxu0
          %v2225 = vadd.f32 %v2130, %v2224
          %v2226 = vpop.f32.mrf.mxu0
          %2227 = vmatprep.mubr.f32.mxu0 0.0
          %v2228 = vand.u32 %v1269, 4294901760
          %v2229 = vsub.f32 %v1269, %v2228
          %v2230 = vand.u32 %v2229, 4294901760
          %2231 = vmatmul.mubr.f32.gmra.mxu0 %v2230
          %v2232 = vpop.f32.mrf.mxu0
          %v2233 = vadd.f32 %v2137, %v2232
          %v2234 = vpop.f32.mrf.mxu0
          %2235 = vmatprep.mubr.f32.mxu0 0.0
          %v2236 = vand.u32 %v1272, 4294901760
          %v2237 = vsub.f32 %v1272, %v2236
          %v2238 = vand.u32 %v2237, 4294901760
          %2239 = vmatmul.mubr.f32.gmra.mxu0 %v2238
          %v2240 = vpop.f32.mrf.mxu0
          %v2241 = vadd.f32 %v2144, %v2240
          %v2242 = vpop.f32.mrf.mxu0
          %2243 = vmatprep.mubr.f32.mxu0 0.0
          %v2244 = vand.u32 %v1275, 4294901760
          %v2245 = vsub.f32 %v1275, %v2244
          %v2246 = vand.u32 %v2245, 4294901760
          %2247 = vmatmul.mubr.f32.gmra.mxu0 %v2246
          %v2248 = vpop.f32.mrf.mxu0
          %v2249 = vadd.f32 %v2151, %v2248
          %v2250 = vpop.f32.mrf.mxu0
          %2251 = vdwg.mxu0
          %2252 = vmatprep.subr.mxu0 0.0
          %2253 = vmatpush1.msra.mxu0 0.0
          %2254 = vmatprep.subr.mxu0 0.0
          %2255 = vmatpush1.msra.mxu0 0.0
          %2256 = vmatprep.subr.mxu0 0.0
          %2257 = vmatpush1.msra.mxu0 0.0
          %2258 = vmatprep.subr.mxu0 0.0
          %2259 = vmatpush1.msra.mxu0 0.0
          %2260 = vmatprep.subr.mxu0 0.0
          %2261 = vmatpush1.msra.mxu0 0.0
          %2262 = vmatprep.subr.mxu0 0.0
          %2263 = vmatpush1.msra.mxu0 0.0
          %2264 = vmatprep.subr.mxu0 0.0
          %2265 = vmatpush1.msra.mxu0 0.0
          %2266 = vmatprep.subr.mxu0 0.0
          %2267 = vmatpush1.msra.mxu0 0.0
          %2268 = vmatprep.subr.mxu0 0.0
          %2269 = vmatpush1.msra.mxu0 0.0
          %2270 = vmatprep.subr.mxu0 0.0
          %2271 = vmatpush1.msra.mxu0 0.0
          %2272 = vmatprep.subr.mxu0 0.0
          %2273 = vmatpush1.msra.mxu0 0.0
          %2274 = vmatprep.subr.mxu0 0.0
          %2275 = vmatpush1.msra.mxu0 0.0
          %2276 = vmatprep.subr.mxu0 0.0
          %2277 = vmatpush1.msra.mxu0 0.0
          %2278 = vmatprep.subr.mxu0 0.0
          %2279 = vmatpush1.msra.mxu0 0.0
          %2280 = vmatprep.subr.mxu0 0.0
          %2281 = vmatpush1.msra.mxu0 0.0
          %2282 = vmatprep.subr.mxu0 0.0
          %v2283 = vand.u32 %v1857, 4294901760
          %v2284 = vsub.f32 %v1857, %v2283
          %v2285 = vand.u32 %v2284, 4294901760
          %2286 = vmatpush1.msra.mxu0 %v2285
          %2287 = vmatprep.subr.mxu0 0.0
          %2288 = vmatpush2.msra.mxu0 0.0
          %2289 = vmatprep.subr.mxu0 0.0
          %2290 = vmatpush2.msra.mxu0 0.0
          %2291 = vmatprep.subr.mxu0 0.0
          %2292 = vmatpush2.msra.mxu0 0.0
          %2293 = vmatprep.subr.mxu0 0.0
          %2294 = vmatpush2.msra.mxu0 0.0
          %2295 = vmatprep.subr.mxu0 0.0
          %2296 = vmatpush2.msra.mxu0 0.0
          %2297 = vmatprep.subr.mxu0 0.0
          %2298 = vmatpush2.msra.mxu0 0.0
          %2299 = vmatprep.subr.mxu0 0.0
          %2300 = vmatpush2.msra.mxu0 0.0
          %2301 = vmatprep.subr.mxu0 0.0
          %2302 = vmatpush2.msra.mxu0 0.0
          %2303 = vmatprep.subr.mxu0 0.0
          %2304 = vmatpush2.msra.mxu0 0.0
          %2305 = vmatprep.subr.mxu0 0.0
          %2306 = vmatpush2.msra.mxu0 0.0
          %2307 = vmatprep.subr.mxu0 0.0
          %2308 = vmatpush2.msra.mxu0 0.0
          %2309 = vmatprep.subr.mxu0 0.0
          %2310 = vmatpush2.msra.mxu0 0.0
          %2311 = vmatprep.subr.mxu0 0.0
          %2312 = vmatpush2.msra.mxu0 0.0
          %2313 = vmatprep.subr.mxu0 0.0
          %2314 = vmatpush2.msra.mxu0 0.0
          %2315 = vmatprep.subr.mxu0 0.0
          %2316 = vmatpush2.msra.mxu0 0.0
          %2317 = vmatprep.subr.mxu0 0.0
          %2318 = vmatpush2.msra.mxu0 0.0
          %2319 = vmatprep.mubr.f32.mxu0 0.0
          %v2320 = vand.u32 %v1266, 4294901760
          %2321 = vmatmul.mubr.f32.gmra.mxu0 %v2320
          %v2322 = vpop.f32.mrf.mxu0
          %v2323 = vadd.f32 %v2225, %v2322
          %v2324 = vpop.f32.mrf.mxu0
          %2325 = vmatprep.mubr.f32.mxu0 0.0
          %v2326 = vand.u32 %v1269, 4294901760
          %2327 = vmatmul.mubr.f32.gmra.mxu0 %v2326
          %v2328 = vpop.f32.mrf.mxu0
          %v2329 = vadd.f32 %v2233, %v2328
          %v2330 = vpop.f32.mrf.mxu0
          %2331 = vmatprep.mubr.f32.mxu0 0.0
          %v2332 = vand.u32 %v1272, 4294901760
          %2333 = vmatmul.mubr.f32.gmra.mxu0 %v2332
          %v2334 = vpop.f32.mrf.mxu0
          %v2335 = vadd.f32 %v2241, %v2334
          %v2336 = vpop.f32.mrf.mxu0
          %2337 = vmatprep.mubr.f32.mxu0 0.0
          %v2338 = vand.u32 %v1275, 4294901760
          %2339 = vmatmul.mubr.f32.gmra.mxu0 %v2338
          %v2340 = vpop.f32.mrf.mxu0
          %v2341 = vadd.f32 %v2249, %v2340
          %v2342 = vpop.f32.mrf.mxu0
          %2343 = vdwg.mxu0
          %2344 = vmatprep.subr.mxu0 0.0
          %2345 = vmatpush1.msra.mxu0 0.0
          %2346 = vmatprep.subr.mxu0 0.0
          %2347 = vmatpush1.msra.mxu0 0.0
          %2348 = vmatprep.subr.mxu0 0.0
          %2349 = vmatpush1.msra.mxu0 0.0
          %2350 = vmatprep.subr.mxu0 0.0
          %2351 = vmatpush1.msra.mxu0 0.0
          %2352 = vmatprep.subr.mxu0 0.0
          %2353 = vmatpush1.msra.mxu0 0.0
          %2354 = vmatprep.subr.mxu0 0.0
          %2355 = vmatpush1.msra.mxu0 0.0
          %2356 = vmatprep.subr.mxu0 0.0
          %2357 = vmatpush1.msra.mxu0 0.0
          %2358 = vmatprep.subr.mxu0 0.0
          %2359 = vmatpush1.msra.mxu0 0.0
          %2360 = vmatprep.subr.mxu0 0.0
          %2361 = vmatpush1.msra.mxu0 0.0
          %2362 = vmatprep.subr.mxu0 0.0
          %2363 = vmatpush1.msra.mxu0 0.0
          %2364 = vmatprep.subr.mxu0 0.0
          %2365 = vmatpush1.msra.mxu0 0.0
          %2366 = vmatprep.subr.mxu0 0.0
          %2367 = vmatpush1.msra.mxu0 0.0
          %2368 = vmatprep.subr.mxu0 0.0
          %2369 = vmatpush1.msra.mxu0 0.0
          %2370 = vmatprep.subr.mxu0 0.0
          %2371 = vmatpush1.msra.mxu0 0.0
          %2372 = vmatprep.subr.mxu0 0.0
          %2373 = vmatpush1.msra.mxu0 0.0
          %2374 = vmatprep.subr.mxu0 0.0
          %v2375 = vand.u32 %v1857, 4294901760
          %2376 = vmatpush1.msra.mxu0 %v2375
          %2377 = vmatprep.subr.mxu0 0.0
          %2378 = vmatpush2.msra.mxu0 0.0
          %2379 = vmatprep.subr.mxu0 0.0
          %2380 = vmatpush2.msra.mxu0 0.0
          %2381 = vmatprep.subr.mxu0 0.0
          %2382 = vmatpush2.msra.mxu0 0.0
          %2383 = vmatprep.subr.mxu0 0.0
          %2384 = vmatpush2.msra.mxu0 0.0
          %2385 = vmatprep.subr.mxu0 0.0
          %2386 = vmatpush2.msra.mxu0 0.0
          %2387 = vmatprep.subr.mxu0 0.0
          %2388 = vmatpush2.msra.mxu0 0.0
          %2389 = vmatprep.subr.mxu0 0.0
          %2390 = vmatpush2.msra.mxu0 0.0
          %2391 = vmatprep.subr.mxu0 0.0
          %2392 = vmatpush2.msra.mxu0 0.0
          %2393 = vmatprep.subr.mxu0 0.0
          %2394 = vmatpush2.msra.mxu0 0.0
          %2395 = vmatprep.subr.mxu0 0.0
          %2396 = vmatpush2.msra.mxu0 0.0
          %2397 = vmatprep.subr.mxu0 0.0
          %2398 = vmatpush2.msra.mxu0 0.0
          %2399 = vmatprep.subr.mxu0 0.0
          %2400 = vmatpush2.msra.mxu0 0.0
          %2401 = vmatprep.subr.mxu0 0.0
          %2402 = vmatpush2.msra.mxu0 0.0
          %2403 = vmatprep.subr.mxu0 0.0
          %2404 = vmatpush2.msra.mxu0 0.0
          %2405 = vmatprep.subr.mxu0 0.0
          %2406 = vmatpush2.msra.mxu0 0.0
          %2407 = vmatprep.subr.mxu0 0.0
          %2408 = vmatpush2.msra.mxu0 0.0
          %2409 = vmatprep.mubr.f32.mxu0 0.0
          %v2410 = vand.u32 %v1266, 4294901760
          %2411 = vmatmul.mubr.f32.gmra.mxu0 %v2410
          %v2412 = vpop.f32.mrf.mxu0
          %v2413 = vadd.f32 %v2323, %v2412
          %v2414 = vpop.f32.mrf.mxu0
          %2415 = vmatprep.mubr.f32.mxu0 0.0
          %v2416 = vand.u32 %v1269, 4294901760
          %2417 = vmatmul.mubr.f32.gmra.mxu0 %v2416
          %v2418 = vpop.f32.mrf.mxu0
          %v2419 = vadd.f32 %v2329, %v2418
          %v2420 = vpop.f32.mrf.mxu0
          %2421 = vmatprep.mubr.f32.mxu0 0.0
          %v2422 = vand.u32 %v1272, 4294901760
          %2423 = vmatmul.mubr.f32.gmra.mxu0 %v2422
          %v2424 = vpop.f32.mrf.mxu0
          %v2425 = vadd.f32 %v2335, %v2424
          %v2426 = vpop.f32.mrf.mxu0
          %2427 = vmatprep.mubr.f32.mxu0 0.0
          %v2428 = vand.u32 %v1275, 4294901760
          %2429 = vmatmul.mubr.f32.gmra.mxu0 %v2428
          %v2430 = vpop.f32.mrf.mxu0
          %v2431 = vadd.f32 %v2341, %v2430
          %v2432 = vpop.f32.mrf.mxu0
          %2433 = vdwg.mxu0
          %v2434 = vmul.f32 %v2413, 0.5
          %v2435 = vmul.f32 %v2419, 0.5
          %v2436 = vmul.f32 %v2425, 0.5
          %v2437 = vmul.f32 %v2431, 0.5
          %v2438 = vtanh.pop %v2434
          %v2439 = vtanh.pop %v2435
          %v2440 = vtanh.pop %v2436
          %v2441 = vtanh.pop %v2437
          %v2442 = vadd.f32 %v2438, 1.0
          %v2443 = vadd.f32 %v2439, 1.0
          %v2444 = vadd.f32 %v2440, 1.0
          %v2445 = vadd.f32 %v2441, 1.0
          %v2446 = vmul.f32 %v2442, 0.5
          %v2447 = vmul.f32 %v2443, 0.5
          %v2448 = vmul.f32 %v2444, 0.5
          %v2449 = vmul.f32 %v2445, 0.5
          %vm2450 = vcmask 7168
          %2451 = vst.msk [vmem:[%s207] sm:$0xff] %vm2450, %v2446
          %2452 = vst.msk [vmem:[%s207 + $0x8] sm:$0xff] %vm2450, %v2447
          %2453 = vst.msk [vmem:[%s207 + $0x10] sm:$0xff] %vm2450, %v2448
          %2454 = vst.msk [vmem:[%s207 + $0x18] sm:$0xff] %vm2450, %v2449
        $region44: #{tpu_custom_call.1} parent=31 // pred_fallthru
          _
        %p2455 = scmp.lt.s32.totalorder %s21, 1
        %s2456 = scalar_select %p2455, %s21, 1
        %s2457 = smul.addr %s2456, 4
        %s2458 = smul.addr %s2457, 8
        %s2459 = scalar_lea.vmem %s3, %s2458
        // Predicated region
        $region45: #{tpu_custom_call.1} parent=31 // pred_check
          %p2460 = pneg %p117
        $region46: #{tpu_custom_call.1} parent=31 // pred_check_branch
          %2462 = sbr.rel (%p2460) target = $region48
        $region47: #{tpu_custom_call.1} parent=31 // pred_region
          _
        $region48: #{tpu_custom_call.1} parent=31 // pred_fallthru
          _
      $region32: #{tpu_custom_call.1} parent=5 // pred_fallthru
        _
      %p2463 = scmp.le.s32.totalorder 2, %s12
      // Predicated region
      $region49: #{tpu_custom_call.1} parent=5 // pred_check
        %p2464 = pneg %p2463
      $region50: #{tpu_custom_call.1} parent=5 // pred_check_branch
        %2466 = sbr.rel (%p2464) target = $region52
      $region51: #{tpu_custom_call.1} parent=5 // pred_region
        %s2467 = ssub.s32 %s12, 2
        // Predicated region
        $region53: #{tpu_custom_call.1} parent=51 // pred_check
          %p2468 = pneg %p123
        $region54: #{tpu_custom_call.1} parent=51 // pred_check_branch
          %2470 = sbr.rel (%p2468) target = $region56
        $region55: #{tpu_custom_call.1} parent=51 // pred_region
          %p2471 = scmp.lt.s32.totalorder %s23, 1
          %s2472 = scalar_select %p2471, %s23, 1
          %s2473 = smul.addr %s2472, 4
          %s2474 = smul.addr %s2473, 8
          %s2475 = scalar_lea.vmem %s3, %s2474
        $region56: #{tpu_custom_call.1} parent=51 // pred_fallthru
          _
      $region52: #{tpu_custom_call.1} parent=5 // pred_fallthru
        _
    $region6: #{tpu_custom_call.1} parent=1 // loop_footer
      %s16 = sadd.s32 1, %s12
    $region7: #{tpu_custom_call.1} parent=1 // loop_footer_branch
      %11 = sbr.rel target = $region3
    $region8: #{tpu_custom_call.1} parent=1 // loop_exit
      _
    %2476 = vsyncpa [#allocation5], 1
    %s2477 = scalar_lea.sflag [#allocation5], 1
    %2478 = vsyncpa %s2477, 1

</llo_original>
